<compile_context>
chip_gen: v5e
topology: v5e:2x2
jax: 0.10.0
libtpu: 0.0.40
codegen_flags: <defaults>
</compile_context>

<pallas_src>
import jax
import jax.numpy as jnp
from jax import lax
from jax.experimental import pallas as pl
from jax.experimental.pallas import tpu as pltpu

MXU_DTYPE = jnp.bfloat16   # matmul-operand dtype (bf16-native MXU on v5e/v6e/v7x)


def _round_up(n, m):
    return ((n + m - 1) // m) * m


def _pick_time_block(t, cap=16):
    """Timesteps per grid step (statically unrolled in the kernel body).
    Divisor of T, <= cap, preferring sublane (8) multiples; amortizes the ~600-cycle
    per-grid-step overhead while keeping register pressure of the unroll bounded."""
    if t <= cap:
        return t
    for d in range(cap - cap % 8, 7, -8):
        if t % d == 0:
            return d
    for d in range(cap, 0, -1):
        if t % d == 0:
            return d
    return 1


def _pick_batch_block(b, cap=128):
    """Batch rows per grid step; divisor of B.  B//BB > 1 lets the 'parallel' batch axis
    be sharded across TensorCores on v7x."""
    if b <= cap:
        return b
    for d in range(cap, 0, -1):
        if b % d == 0:
            return d
    return b


def _vmem_limit_bytes(BB, TT, I, Hp, Op):
    blocks = 2 * (BB * TT * I * 4 + BB * TT * Op * 4)              # double-buffered x / out
    weights = 2 * (I * 4 * Hp + Hp * 4 * Hp + Hp * Op) + 4 * (4 * Hp + Op)   # single-buffered
    scratch = 2 * BB * Hp * 4                                      # h, c carried state
    need = blocks + weights + scratch
    # 2x headroom, floor at 32 MiB (safe everywhere), cap at 64 MiB (v7x physical VMEM).
    return int(min(64 * 2**20, max(32 * 2**20, 2 * need)))


# ---------------------------------------------------------------------------
# Fused kernel: per time block -> input projection + serial LSTM recurrence + fc head.
# h / c are carried across time-block grid steps in VMEM scratch.
# ---------------------------------------------------------------------------
def _lstm_fused_kernel(x_ref, w_ih_ref, w_hh_ref, b_ref, w_fc_ref, b_fc_ref,
                       out_ref, h_scr, c_scr):
    t_blk = pl.program_id(1)

    @pl.when(t_blk == 0)
    def _():                                   # new batch block: reset carried state
        h_scr[...] = jnp.zeros_like(h_scr)
        c_scr[...] = jnp.zeros_like(c_scr)

    Hp = h_scr.shape[-1]
    TT = x_ref.shape[1]

    w_ih = w_ih_ref[...]                       # (I , 4Hp) bf16, resident, single-buffered
    w_hh = w_hh_ref[...]                       # (Hp, 4Hp) bf16, resident
    bias = b_ref[...]                          # (1 , 4Hp) f32  (b_ih + b_hh, gate-padded)
    w_fc = w_fc_ref[...]                       # (Hp,  Op) bf16, resident
    b_fc = b_fc_ref[...]                       # (1 ,  Op) f32

    h = h_scr[...]                             # (BB, Hp) f32 carried state
    c = c_scr[...]

    def sigmoid(v):                            # 1 EUP op (tanh) instead of exp + recip
        return 0.5 * jnp.tanh(0.5 * v) + 0.5

    # Serial recurrence over the time block.  tt is a static Python index, so every
    # slice/store below is a static view (no dynamic sublane indexing on the hot path).
    for tt in range(TT):
        x_t = x_ref[:, tt, :].astype(w_ih.dtype)                       # (BB, I) bf16
        g = (jnp.dot(x_t, w_ih, preferred_element_type=jnp.float32)
             + jnp.dot(h.astype(w_hh.dtype), w_hh,
                       preferred_element_type=jnp.float32)
             + bias)                                                   # (BB, 4Hp) f32
        # Hp is a multiple of 128 -> gate slices are lane-tile aligned.
        i_g = sigmoid(g[:, 0 * Hp:1 * Hp])
        f_g = sigmoid(g[:, 1 * Hp:2 * Hp])
        g_g = jnp.tanh(g[:, 2 * Hp:3 * Hp])
        o_g = sigmoid(g[:, 3 * Hp:4 * Hp])
        c = f_g * c + i_g * g_g
        h = o_g * jnp.tanh(c)
        # fc head fused into the step epilogue: hidden states never leave VMEM.
        out_ref[:, tt, :] = (jnp.dot(h.astype(w_fc.dtype), w_fc,
                                     preferred_element_type=jnp.float32)
                             + b_fc).astype(out_ref.dtype)

    h_scr[...] = h
    c_scr[...] = c


# ---------------------------------------------------------------------------
# Wrapper matching WithLinear.forward: out = fc(lstm(x).outputs)
# ---------------------------------------------------------------------------
@jax.jit
def lstm_with_linear(x, w_ih, w_hh, b_ih, b_hh, w_fc, b_fc):
    """x: (B, T, I) f32, batch_first. Returns fc(outputs): (B, T, O) f32."""
    B, T, I = x.shape
    H = w_hh.shape[1]
    O = w_fc.shape[0]
    Hp = _round_up(H, 128)     # padded hidden (lane-aligned gate blocks)
    Op = _round_up(O, 128)     # padded fc output (lane-dense stores)

    # --- Weight preprocessing (small tensors, done once per call under jit). ---
    # Gate order i, f, g, o; each gate's H columns zero-padded to Hp so the kernel's
    # gate slices are lane-aligned.  Padded columns give sigma(0)/tanh(0) -> padded
    # h/c entries stay exactly 0 and never influence the real lanes.
    w4 = jnp.pad(w_ih.reshape(4, H, I), ((0, 0), (0, Hp - H), (0, 0)))
    w_ih_t = jnp.transpose(w4, (2, 0, 1)).reshape(I, 4 * Hp).astype(MXU_DTYPE)

    u4 = jnp.pad(w_hh.reshape(4, H, H), ((0, 0), (0, Hp - H), (0, Hp - H)))
    w_hh_t = jnp.transpose(u4, (2, 0, 1)).reshape(Hp, 4 * Hp).astype(MXU_DTYPE)

    b4 = jnp.pad((b_ih + b_hh).reshape(4, H), ((0, 0), (0, Hp - H)))
    bias = b4.reshape(1, 4 * Hp).astype(jnp.float32)

    w_fc_t = jnp.pad(jnp.transpose(w_fc), ((0, Hp - H), (0, Op - O))).astype(MXU_DTYPE)
    b_fc_p = jnp.pad(b_fc, (0, Op - O)).reshape(1, Op).astype(jnp.float32)

    TT = _pick_time_block(T)
    BB = _pick_batch_block(B)

    out_padded = pl.pallas_call(
        _lstm_fused_kernel,
        out_shape=jax.ShapeDtypeStruct((B, T, Op), jnp.float32),
        grid_spec=pltpu.PrefetchScalarGridSpec(
            num_scalar_prefetch=0,
            grid=(B // BB, T // TT),                       # (batch blocks, time blocks)
            in_specs=[
                # x streamed per (batch, time) block straight from its (B, T, I) layout.
                pl.BlockSpec((BB, TT, I), lambda b, t: (b, t, 0)),
                # Resident parameters: constant index_map, single-buffered.
                pl.BlockSpec((I, 4 * Hp), lambda b, t: (0, 0),
                             pipeline_mode=pl.Buffered(1)),
                pl.BlockSpec((Hp, 4 * Hp), lambda b, t: (0, 0),
                             pipeline_mode=pl.Buffered(1)),
                pl.BlockSpec((1, 4 * Hp), lambda b, t: (0, 0),
                             pipeline_mode=pl.Buffered(1)),
                pl.BlockSpec((Hp, Op), lambda b, t: (0, 0),
                             pipeline_mode=pl.Buffered(1)),
                pl.BlockSpec((1, Op), lambda b, t: (0, 0),
                             pipeline_mode=pl.Buffered(1)),
            ],
            out_specs=pl.BlockSpec((BB, TT, Op), lambda b, t: (b, t, 0)),
            scratch_shapes=[
                pltpu.VMEM((BB, Hp), jnp.float32),   # h carried across time blocks
                pltpu.VMEM((BB, Hp), jnp.float32),   # c carried across time blocks
            ],
        ),
        compiler_params=pltpu.CompilerParams(
            # batch blocks are independent (shardable on v7x's 2 TCs); time is serial.
            dimension_semantics=("parallel", "arbitrary"),
            vmem_limit_bytes=_vmem_limit_bytes(BB, TT, I, Hp, Op),
        ),
    )(x, w_ih_t, w_hh_t, bias, w_fc_t, b_fc_p)

    return out_padded[..., :O]                                  # (B, T, O)


def lstm_with_linear_ref(x, w_ih, w_hh, b_ih, b_hh, w_fc, b_fc):
    """Pure-JAX f32 reference matching nn.LSTM(batch_first) + nn.Linear(outputs)."""
    B, T, I = x.shape
    H = w_hh.shape[1]

    def step(carry, x_t):
        h, c = carry
        gates = x_t @ w_ih.T + b_ih + h @ w_hh.T + b_hh
        i_g = jax.nn.sigmoid(gates[:, 0 * H:1 * H])
        f_g = jax.nn.sigmoid(gates[:, 1 * H:2 * H])
        g_g = jnp.tanh(gates[:, 2 * H:3 * H])
        o_g = jax.nn.sigmoid(gates[:, 3 * H:4 * H])
        c_new = f_g * c + i_g * g_g
        h_new = o_g * jnp.tanh(c_new)
        return (h_new, c_new), h_new

    h0 = jnp.zeros((B, H), jnp.float32)
    c0 = jnp.zeros((B, H), jnp.float32)
    _, hs = lax.scan(step, (h0, c0), jnp.transpose(x, (1, 0, 2)))   # (T, B, H)
    out = hs @ w_fc.T + b_fc                                        # (T, B, O)
    return jnp.transpose(out, (1, 0, 2))                            # (B, T, O)


if __name__ == "__main__":
    B, T, I, H, O = 2, 8, 16, 32, 8

    key = jax.random.PRNGKey(0)
    ks = jax.random.split(key, 7)
    bound = 1.0 / jnp.sqrt(jnp.float32(H))   # PyTorch LSTM/Linear-style uniform init

    x = jax.random.normal(ks[0], (B, T, I), jnp.float32)
    w_ih = jax.random.uniform(ks[1], (4 * H, I), jnp.float32, -bound, bound)
    w_hh = jax.random.uniform(ks[2], (4 * H, H), jnp.float32, -bound, bound)
    b_ih = jax.random.uniform(ks[3], (4 * H,), jnp.float32, -bound, bound)
    b_hh = jax.random.uniform(ks[4], (4 * H,), jnp.float32, -bound, bound)
    w_fc = jax.random.uniform(ks[5], (O, H), jnp.float32, -bound, bound)
    b_fc = jax.random.uniform(ks[6], (O,), jnp.float32, -bound, bound)

    out = jax.block_until_ready(
        lstm_with_linear(x, w_ih, w_hh, b_ih, b_hh, w_fc, b_fc))
    ref = lstm_with_linear_ref(x, w_ih, w_hh, b_ih, b_hh, w_fc, b_fc)

    assert out.shape == (B, T, O), out.shape
    # bf16 MXU operands (f32 accumulate / f32 elementwise) vs pure-f32 reference.
    assert jnp.allclose(out, ref, atol=2e-2, rtol=2e-2), float(jnp.max(jnp.abs(out - ref)))

    print("KERNEL_OK")
</pallas_src>

<mosaic_0001>
module attributes {stable_mosaic.version = 11 : i64} {
  func.func @_lstm_fused_kernel(%arg0: i32, %arg1: i32, %arg2: memref<2x8x16xf32, #tpu.memory_space<vmem>>, %arg3: memref<16x512xbf16, #tpu.memory_space<vmem>>, %arg4: memref<128x512xbf16, #tpu.memory_space<vmem>>, %arg5: memref<1x512xf32, #tpu.memory_space<vmem>>, %arg6: memref<128x128xbf16, #tpu.memory_space<vmem>>, %arg7: memref<1x128xf32, #tpu.memory_space<vmem>>, %arg8: memref<2x8x128xf32, #tpu.memory_space<vmem>>, %arg9: memref<2x128xf32, #tpu.memory_space<vmem>>, %arg10: memref<2x128xf32, #tpu.memory_space<vmem>>) attributes {dimension_semantics = [#tpu.dimension_semantics<parallel>, #tpu.dimension_semantics<arbitrary>], iteration_bounds = array<i64: 1, 1>, scalar_prefetch = 0 : i64, scratch_operands = 2 : i64, tpu.core_type = #tpu.core_type<tc>, window_params = [{transform_indices = @transform_0, window_bounds = array<i64: 2, 8, 16>}, {pipeline_mode = #tpu.pipeline_mode<synchronous>, transform_indices = @transform_1, window_bounds = array<i64: 16, 512>}, {pipeline_mode = #tpu.pipeline_mode<synchronous>, transform_indices = @transform_2, window_bounds = array<i64: 128, 512>}, {pipeline_mode = #tpu.pipeline_mode<synchronous>, transform_indices = @transform_3, window_bounds = array<i64: 1, 512>}, {pipeline_mode = #tpu.pipeline_mode<synchronous>, transform_indices = @transform_4, window_bounds = array<i64: 128, 128>}, {pipeline_mode = #tpu.pipeline_mode<synchronous>, transform_indices = @transform_5, window_bounds = array<i64: 1, 128>}, {transform_indices = @transform_6, window_bounds = array<i64: 2, 8, 128>}]} {
    %c0_i32 = arith.constant 0 : i32
    %0 = arith.cmpi eq, %arg1, %c0_i32 : i32
    %1 = arith.extui %0 : i1 to i32
    %c0_i32_0 = arith.constant 0 : i32
    %2 = arith.cmpi ne, %1, %c0_i32_0 : i32
    scf.if %2 {
      %cst_154 = arith.constant 0.000000e+00 : f32
      %388 = vector.broadcast %cst_154 : f32 to vector<2x128xf32>
      %c0_155 = arith.constant 0 : index
      %c0_156 = arith.constant 0 : index
      %389 = vector.load %arg9[%c0_155, %c0_156] : memref<2x128xf32, #tpu.memory_space<vmem>>, vector<2x128xf32>
      tpu.vector_store %arg9[%c0_155, %c0_156], %388 {strides = array<i32>} : memref<2x128xf32, #tpu.memory_space<vmem>>, vector<2x128xf32>,
      %cst_157 = arith.constant 0.000000e+00 : f32
      %390 = vector.broadcast %cst_157 : f32 to vector<2x128xf32>
      %c0_158 = arith.constant 0 : index
      %c0_159 = arith.constant 0 : index
      %391 = vector.load %arg10[%c0_158, %c0_159] : memref<2x128xf32, #tpu.memory_space<vmem>>, vector<2x128xf32>
      tpu.vector_store %arg10[%c0_158, %c0_159], %390 {strides = array<i32>} : memref<2x128xf32, #tpu.memory_space<vmem>>, vector<2x128xf32>,
    } else {
    }
    %c0 = arith.constant 0 : index
    %c0_1 = arith.constant 0 : index
    %3 = vector.load %arg3[%c0, %c0_1] : memref<16x512xbf16, #tpu.memory_space<vmem>>, vector<16x512xbf16>
    %c0_2 = arith.constant 0 : index
    %c0_3 = arith.constant 0 : index
    %4 = vector.load %arg4[%c0_2, %c0_3] : memref<128x512xbf16, #tpu.memory_space<vmem>>, vector<128x512xbf16>
    %c0_4 = arith.constant 0 : index
    %c0_5 = arith.constant 0 : index
    %5 = vector.load %arg5[%c0_4, %c0_5] : memref<1x512xf32, #tpu.memory_space<vmem>>, vector<1x512xf32>
    %c0_6 = arith.constant 0 : index
    %c0_7 = arith.constant 0 : index
    %6 = vector.load %arg6[%c0_6, %c0_7] : memref<128x128xbf16, #tpu.memory_space<vmem>>, vector<128x128xbf16>
    %c0_8 = arith.constant 0 : index
    %c0_9 = arith.constant 0 : index
    %7 = vector.load %arg7[%c0_8, %c0_9] : memref<1x128xf32, #tpu.memory_space<vmem>>, vector<1x128xf32>
    %c0_10 = arith.constant 0 : index
    %c0_11 = arith.constant 0 : index
    %8 = vector.load %arg9[%c0_10, %c0_11] : memref<2x128xf32, #tpu.memory_space<vmem>>, vector<2x128xf32>
    %c0_12 = arith.constant 0 : index
    %c0_13 = arith.constant 0 : index
    %9 = vector.load %arg10[%c0_12, %c0_13] : memref<2x128xf32, #tpu.memory_space<vmem>>, vector<2x128xf32>
    %c0_14 = arith.constant 0 : index
    %c0_15 = arith.constant 0 : index
    %c0_16 = arith.constant 0 : index
    %10 = vector.load %arg2[%c0_14, %c0_15, %c0_16] : memref<2x8x16xf32, #tpu.memory_space<vmem>>, vector<2x1x16xf32>
    %11 = vector.shape_cast %10 : vector<2x1x16xf32> to vector<2x16xf32>
    %12 = arith.truncf %11 : vector<2x16xf32> to vector<2x16xbf16>
    %cst = arith.constant dense<0.000000e+00> : vector<2x512xf32>
    %13 = tpu.matmul %12, %3, %cst {dimension_numbers = #tpu.dot_dimension_numbers<[1], [0], [0], [1], [0, 0, 1, 1], [], []>} : vector<2x16xbf16>, vector<16x512xbf16>, vector<2x512xf32> -> vector<2x512xf32>
    %14 = arith.truncf %8 : vector<2x128xf32> to vector<2x128xbf16>
    %cst_17 = arith.constant dense<0.000000e+00> : vector<2x512xf32>
    %15 = tpu.matmul %14, %4, %cst_17 {dimension_numbers = #tpu.dot_dimension_numbers<[1], [0], [0], [1], [0, 0, 1, 1], [], []>} : vector<2x128xbf16>, vector<128x512xbf16>, vector<2x512xf32> -> vector<2x512xf32>
    %16 = arith.addf %13, %15 : vector<2x512xf32>
    %17 = vector.broadcast %5 : vector<1x512xf32> to vector<2x512xf32>
    %18 = arith.addf %16, %17 : vector<2x512xf32>
    %19 = vector.extract_strided_slice %18 {offsets = [0, 0], sizes = [2, 128], strides = [1, 1]} : vector<2x512xf32> to vector<2x128xf32>
    %cst_18 = arith.constant 5.000000e-01 : f32
    %20 = vector.broadcast %cst_18 : f32 to vector<2x128xf32>
    %21 = arith.mulf %20, %19 : vector<2x128xf32>
    %22 = math.tanh %21 : vector<2x128xf32>
    %cst_19 = arith.constant 5.000000e-01 : f32
    %23 = vector.broadcast %cst_19 : f32 to vector<2x128xf32>
    %24 = arith.mulf %23, %22 : vector<2x128xf32>
    %cst_20 = arith.constant 5.000000e-01 : f32
    %25 = vector.broadcast %cst_20 : f32 to vector<2x128xf32>
    %26 = arith.addf %24, %25 : vector<2x128xf32>
    %27 = vector.extract_strided_slice %18 {offsets = [0, 128], sizes = [2, 128], strides = [1, 1]} : vector<2x512xf32> to vector<2x128xf32>
    %cst_21 = arith.constant 5.000000e-01 : f32
    %28 = vector.broadcast %cst_21 : f32 to vector<2x128xf32>
    %29 = arith.mulf %28, %27 : vector<2x128xf32>
    %30 = math.tanh %29 : vector<2x128xf32>
    %cst_22 = arith.constant 5.000000e-01 : f32
    %31 = vector.broadcast %cst_22 : f32 to vector<2x128xf32>
    %32 = arith.mulf %31, %30 : vector<2x128xf32>
    %cst_23 = arith.constant 5.000000e-01 : f32
    %33 = vector.broadcast %cst_23 : f32 to vector<2x128xf32>
    %34 = arith.addf %32, %33 : vector<2x128xf32>
    %35 = vector.extract_strided_slice %18 {offsets = [0, 256], sizes = [2, 128], strides = [1, 1]} : vector<2x512xf32> to vector<2x128xf32>
    %36 = math.tanh %35 : vector<2x128xf32>
    %37 = vector.extract_strided_slice %18 {offsets = [0, 384], sizes = [2, 128], strides = [1, 1]} : vector<2x512xf32> to vector<2x128xf32>
    %cst_24 = arith.constant 5.000000e-01 : f32
    %38 = vector.broadcast %cst_24 : f32 to vector<2x128xf32>
    %39 = arith.mulf %38, %37 : vector<2x128xf32>
    %40 = math.tanh %39 : vector<2x128xf32>
    %cst_25 = arith.constant 5.000000e-01 : f32
    %41 = vector.broadcast %cst_25 : f32 to vector<2x128xf32>
    %42 = arith.mulf %41, %40 : vector<2x128xf32>
    %cst_26 = arith.constant 5.000000e-01 : f32
    %43 = vector.broadcast %cst_26 : f32 to vector<2x128xf32>
    %44 = arith.addf %42, %43 : vector<2x128xf32>
    %45 = arith.mulf %34, %9 : vector<2x128xf32>
    %46 = arith.mulf %26, %36 : vector<2x128xf32>
    %47 = arith.addf %45, %46 : vector<2x128xf32>
    %48 = math.tanh %47 : vector<2x128xf32>
    %49 = arith.mulf %44, %48 : vector<2x128xf32>
    %50 = arith.truncf %49 : vector<2x128xf32> to vector<2x128xbf16>
    %cst_27 = arith.constant dense<0.000000e+00> : vector<2x128xf32>
    %51 = tpu.matmul %50, %6, %cst_27 {dimension_numbers = #tpu.dot_dimension_numbers<[1], [0], [0], [1], [0, 0, 1, 1], [], []>} : vector<2x128xbf16>, vector<128x128xbf16>, vector<2x128xf32> -> vector<2x128xf32>
    %52 = vector.broadcast %7 : vector<1x128xf32> to vector<2x128xf32>
    %53 = arith.addf %51, %52 : vector<2x128xf32>
    %c0_28 = arith.constant 0 : index
    %c0_29 = arith.constant 0 : index
    %c0_30 = arith.constant 0 : index
    %54 = vector.load %arg8[%c0_28, %c0_29, %c0_30] : memref<2x8x128xf32, #tpu.memory_space<vmem>>, vector<2x1x128xf32>
    %55 = vector.shape_cast %54 : vector<2x1x128xf32> to vector<2x128xf32>
    %56 = vector.shape_cast %53 : vector<2x128xf32> to vector<2x1x128xf32>
    tpu.vector_store %arg8[%c0_28, %c0_29, %c0_30], %56 {strides = array<i32>} : memref<2x8x128xf32, #tpu.memory_space<vmem>>, vector<2x1x128xf32>,
    %c0_31 = arith.constant 0 : index
    %c1 = arith.constant 1 : index
    %c0_32 = arith.constant 0 : index
    %57 = vector.load %arg2[%c0_31, %c1, %c0_32] : memref<2x8x16xf32, #tpu.memory_space<vmem>>, vector<2x1x16xf32>
    %58 = vector.shape_cast %57 : vector<2x1x16xf32> to vector<2x16xf32>
    %59 = arith.truncf %58 : vector<2x16xf32> to vector<2x16xbf16>
    %cst_33 = arith.constant dense<0.000000e+00> : vector<2x512xf32>
    %60 = tpu.matmul %59, %3, %cst_33 {dimension_numbers = #tpu.dot_dimension_numbers<[1], [0], [0], [1], [0, 0, 1, 1], [], []>} : vector<2x16xbf16>, vector<16x512xbf16>, vector<2x512xf32> -> vector<2x512xf32>
    %61 = arith.truncf %49 : vector<2x128xf32> to vector<2x128xbf16>
    %cst_34 = arith.constant dense<0.000000e+00> : vector<2x512xf32>
    %62 = tpu.matmul %61, %4, %cst_34 {dimension_numbers = #tpu.dot_dimension_numbers<[1], [0], [0], [1], [0, 0, 1, 1], [], []>} : vector<2x128xbf16>, vector<128x512xbf16>, vector<2x512xf32> -> vector<2x512xf32>
    %63 = arith.addf %60, %62 : vector<2x512xf32>
    %64 = vector.broadcast %5 : vector<1x512xf32> to vector<2x512xf32>
    %65 = arith.addf %63, %64 : vector<2x512xf32>
    %66 = vector.extract_strided_slice %65 {offsets = [0, 0], sizes = [2, 128], strides = [1, 1]} : vector<2x512xf32> to vector<2x128xf32>
    %cst_35 = arith.constant 5.000000e-01 : f32
    %67 = vector.broadcast %cst_35 : f32 to vector<2x128xf32>
    %68 = arith.mulf %67, %66 : vector<2x128xf32>
    %69 = math.tanh %68 : vector<2x128xf32>
    %cst_36 = arith.constant 5.000000e-01 : f32
    %70 = vector.broadcast %cst_36 : f32 to vector<2x128xf32>
    %71 = arith.mulf %70, %69 : vector<2x128xf32>
    %cst_37 = arith.constant 5.000000e-01 : f32
    %72 = vector.broadcast %cst_37 : f32 to vector<2x128xf32>
    %73 = arith.addf %71, %72 : vector<2x128xf32>
    %74 = vector.extract_strided_slice %65 {offsets = [0, 128], sizes = [2, 128], strides = [1, 1]} : vector<2x512xf32> to vector<2x128xf32>
    %cst_38 = arith.constant 5.000000e-01 : f32
    %75 = vector.broadcast %cst_38 : f32 to vector<2x128xf32>
    %76 = arith.mulf %75, %74 : vector<2x128xf32>
    %77 = math.tanh %76 : vector<2x128xf32>
    %cst_39 = arith.constant 5.000000e-01 : f32
    %78 = vector.broadcast %cst_39 : f32 to vector<2x128xf32>
    %79 = arith.mulf %78, %77 : vector<2x128xf32>
    %cst_40 = arith.constant 5.000000e-01 : f32
    %80 = vector.broadcast %cst_40 : f32 to vector<2x128xf32>
    %81 = arith.addf %79, %80 : vector<2x128xf32>
    %82 = vector.extract_strided_slice %65 {offsets = [0, 256], sizes = [2, 128], strides = [1, 1]} : vector<2x512xf32> to vector<2x128xf32>
    %83 = math.tanh %82 : vector<2x128xf32>
    %84 = vector.extract_strided_slice %65 {offsets = [0, 384], sizes = [2, 128], strides = [1, 1]} : vector<2x512xf32> to vector<2x128xf32>
    %cst_41 = arith.constant 5.000000e-01 : f32
    %85 = vector.broadcast %cst_41 : f32 to vector<2x128xf32>
    %86 = arith.mulf %85, %84 : vector<2x128xf32>
    %87 = math.tanh %86 : vector<2x128xf32>
    %cst_42 = arith.constant 5.000000e-01 : f32
    %88 = vector.broadcast %cst_42 : f32 to vector<2x128xf32>
    %89 = arith.mulf %88, %87 : vector<2x128xf32>
    %cst_43 = arith.constant 5.000000e-01 : f32
    %90 = vector.broadcast %cst_43 : f32 to vector<2x128xf32>
    %91 = arith.addf %89, %90 : vector<2x128xf32>
    %92 = arith.mulf %81, %47 : vector<2x128xf32>
    %93 = arith.mulf %73, %83 : vector<2x128xf32>
    %94 = arith.addf %92, %93 : vector<2x128xf32>
    %95 = math.tanh %94 : vector<2x128xf32>
    %96 = arith.mulf %91, %95 : vector<2x128xf32>
    %97 = arith.truncf %96 : vector<2x128xf32> to vector<2x128xbf16>
    %cst_44 = arith.constant dense<0.000000e+00> : vector<2x128xf32>
    %98 = tpu.matmul %97, %6, %cst_44 {dimension_numbers = #tpu.dot_dimension_numbers<[1], [0], [0], [1], [0, 0, 1, 1], [], []>} : vector<2x128xbf16>, vector<128x128xbf16>, vector<2x128xf32> -> vector<2x128xf32>
    %99 = vector.broadcast %7 : vector<1x128xf32> to vector<2x128xf32>
    %100 = arith.addf %98, %99 : vector<2x128xf32>
    %c0_45 = arith.constant 0 : index
    %c1_46 = arith.constant 1 : index
    %c0_47 = arith.constant 0 : index
    %101 = vector.load %arg8[%c0_45, %c1_46, %c0_47] : memref<2x8x128xf32, #tpu.memory_space<vmem>>, vector<2x1x128xf32>
    %102 = vector.shape_cast %101 : vector<2x1x128xf32> to vector<2x128xf32>
    %103 = vector.shape_cast %100 : vector<2x128xf32> to vector<2x1x128xf32>
    tpu.vector_store %arg8[%c0_45, %c1_46, %c0_47], %103 {strides = array<i32>} : memref<2x8x128xf32, #tpu.memory_space<vmem>>, vector<2x1x128xf32>,
    %c0_48 = arith.constant 0 : index
    %c2 = arith.constant 2 : index
    %c0_49 = arith.constant 0 : index
    %104 = vector.load %arg2[%c0_48, %c2, %c0_49] : memref<2x8x16xf32, #tpu.memory_space<vmem>>, vector<2x1x16xf32>
    %105 = vector.shape_cast %104 : vector<2x1x16xf32> to vector<2x16xf32>
    %106 = arith.truncf %105 : vector<2x16xf32> to vector<2x16xbf16>
    %cst_50 = arith.constant dense<0.000000e+00> : vector<2x512xf32>
    %107 = tpu.matmul %106, %3, %cst_50 {dimension_numbers = #tpu.dot_dimension_numbers<[1], [0], [0], [1], [0, 0, 1, 1], [], []>} : vector<2x16xbf16>, vector<16x512xbf16>, vector<2x512xf32> -> vector<2x512xf32>
    %108 = arith.truncf %96 : vector<2x128xf32> to vector<2x128xbf16>
    %cst_51 = arith.constant dense<0.000000e+00> : vector<2x512xf32>
    %109 = tpu.matmul %108, %4, %cst_51 {dimension_numbers = #tpu.dot_dimension_numbers<[1], [0], [0], [1], [0, 0, 1, 1], [], []>} : vector<2x128xbf16>, vector<128x512xbf16>, vector<2x512xf32> -> vector<2x512xf32>
    %110 = arith.addf %107, %109 : vector<2x512xf32>
    %111 = vector.broadcast %5 : vector<1x512xf32> to vector<2x512xf32>
    %112 = arith.addf %110, %111 : vector<2x512xf32>
    %113 = vector.extract_strided_slice %112 {offsets = [0, 0], sizes = [2, 128], strides = [1, 1]} : vector<2x512xf32> to vector<2x128xf32>
    %cst_52 = arith.constant 5.000000e-01 : f32
    %114 = vector.broadcast %cst_52 : f32 to vector<2x128xf32>
    %115 = arith.mulf %114, %113 : vector<2x128xf32>
    %116 = math.tanh %115 : vector<2x128xf32>
    %cst_53 = arith.constant 5.000000e-01 : f32
    %117 = vector.broadcast %cst_53 : f32 to vector<2x128xf32>
    %118 = arith.mulf %117, %116 : vector<2x128xf32>
    %cst_54 = arith.constant 5.000000e-01 : f32
    %119 = vector.broadcast %cst_54 : f32 to vector<2x128xf32>
    %120 = arith.addf %118, %119 : vector<2x128xf32>
    %121 = vector.extract_strided_slice %112 {offsets = [0, 128], sizes = [2, 128], strides = [1, 1]} : vector<2x512xf32> to vector<2x128xf32>
    %cst_55 = arith.constant 5.000000e-01 : f32
    %122 = vector.broadcast %cst_55 : f32 to vector<2x128xf32>
    %123 = arith.mulf %122, %121 : vector<2x128xf32>
    %124 = math.tanh %123 : vector<2x128xf32>
    %cst_56 = arith.constant 5.000000e-01 : f32
    %125 = vector.broadcast %cst_56 : f32 to vector<2x128xf32>
    %126 = arith.mulf %125, %124 : vector<2x128xf32>
    %cst_57 = arith.constant 5.000000e-01 : f32
    %127 = vector.broadcast %cst_57 : f32 to vector<2x128xf32>
    %128 = arith.addf %126, %127 : vector<2x128xf32>
    %129 = vector.extract_strided_slice %112 {offsets = [0, 256], sizes = [2, 128], strides = [1, 1]} : vector<2x512xf32> to vector<2x128xf32>
    %130 = math.tanh %129 : vector<2x128xf32>
    %131 = vector.extract_strided_slice %112 {offsets = [0, 384], sizes = [2, 128], strides = [1, 1]} : vector<2x512xf32> to vector<2x128xf32>
    %cst_58 = arith.constant 5.000000e-01 : f32
    %132 = vector.broadcast %cst_58 : f32 to vector<2x128xf32>
    %133 = arith.mulf %132, %131 : vector<2x128xf32>
    %134 = math.tanh %133 : vector<2x128xf32>
    %cst_59 = arith.constant 5.000000e-01 : f32
    %135 = vector.broadcast %cst_59 : f32 to vector<2x128xf32>
    %136 = arith.mulf %135, %134 : vector<2x128xf32>
    %cst_60 = arith.constant 5.000000e-01 : f32
    %137 = vector.broadcast %cst_60 : f32 to vector<2x128xf32>
    %138 = arith.addf %136, %137 : vector<2x128xf32>
    %139 = arith.mulf %128, %94 : vector<2x128xf32>
    %140 = arith.mulf %120, %130 : vector<2x128xf32>
    %141 = arith.addf %139, %140 : vector<2x128xf32>
    %142 = math.tanh %141 : vector<2x128xf32>
    %143 = arith.mulf %138, %142 : vector<2x128xf32>
    %144 = arith.truncf %143 : vector<2x128xf32> to vector<2x128xbf16>
    %cst_61 = arith.constant dense<0.000000e+00> : vector<2x128xf32>
    %145 = tpu.matmul %144, %6, %cst_61 {dimension_numbers = #tpu.dot_dimension_numbers<[1], [0], [0], [1], [0, 0, 1, 1], [], []>} : vector<2x128xbf16>, vector<128x128xbf16>, vector<2x128xf32> -> vector<2x128xf32>
    %146 = vector.broadcast %7 : vector<1x128xf32> to vector<2x128xf32>
    %147 = arith.addf %145, %146 : vector<2x128xf32>
    %c0_62 = arith.constant 0 : index
    %c2_63 = arith.constant 2 : index
    %c0_64 = arith.constant 0 : index
    %148 = vector.load %arg8[%c0_62, %c2_63, %c0_64] : memref<2x8x128xf32, #tpu.memory_space<vmem>>, vector<2x1x128xf32>
    %149 = vector.shape_cast %148 : vector<2x1x128xf32> to vector<2x128xf32>
    %150 = vector.shape_cast %147 : vector<2x128xf32> to vector<2x1x128xf32>
    tpu.vector_store %arg8[%c0_62, %c2_63, %c0_64], %150 {strides = array<i32>} : memref<2x8x128xf32, #tpu.memory_space<vmem>>, vector<2x1x128xf32>,
    %c0_65 = arith.constant 0 : index
    %c3 = arith.constant 3 : index
    %c0_66 = arith.constant 0 : index
    %151 = vector.load %arg2[%c0_65, %c3, %c0_66] : memref<2x8x16xf32, #tpu.memory_space<vmem>>, vector<2x1x16xf32>
    %152 = vector.shape_cast %151 : vector<2x1x16xf32> to vector<2x16xf32>
    %153 = arith.truncf %152 : vector<2x16xf32> to vector<2x16xbf16>
    %cst_67 = arith.constant dense<0.000000e+00> : vector<2x512xf32>
    %154 = tpu.matmul %153, %3, %cst_67 {dimension_numbers = #tpu.dot_dimension_numbers<[1], [0], [0], [1], [0, 0, 1, 1], [], []>} : vector<2x16xbf16>, vector<16x512xbf16>, vector<2x512xf32> -> vector<2x512xf32>
    %155 = arith.truncf %143 : vector<2x128xf32> to vector<2x128xbf16>
    %cst_68 = arith.constant dense<0.000000e+00> : vector<2x512xf32>
    %156 = tpu.matmul %155, %4, %cst_68 {dimension_numbers = #tpu.dot_dimension_numbers<[1], [0], [0], [1], [0, 0, 1, 1], [], []>} : vector<2x128xbf16>, vector<128x512xbf16>, vector<2x512xf32> -> vector<2x512xf32>
    %157 = arith.addf %154, %156 : vector<2x512xf32>
    %158 = vector.broadcast %5 : vector<1x512xf32> to vector<2x512xf32>
    %159 = arith.addf %157, %158 : vector<2x512xf32>
    %160 = vector.extract_strided_slice %159 {offsets = [0, 0], sizes = [2, 128], strides = [1, 1]} : vector<2x512xf32> to vector<2x128xf32>
    %cst_69 = arith.constant 5.000000e-01 : f32
    %161 = vector.broadcast %cst_69 : f32 to vector<2x128xf32>
    %162 = arith.mulf %161, %160 : vector<2x128xf32>
    %163 = math.tanh %162 : vector<2x128xf32>
    %cst_70 = arith.constant 5.000000e-01 : f32
    %164 = vector.broadcast %cst_70 : f32 to vector<2x128xf32>
    %165 = arith.mulf %164, %163 : vector<2x128xf32>
    %cst_71 = arith.constant 5.000000e-01 : f32
    %166 = vector.broadcast %cst_71 : f32 to vector<2x128xf32>
    %167 = arith.addf %165, %166 : vector<2x128xf32>
    %168 = vector.extract_strided_slice %159 {offsets = [0, 128], sizes = [2, 128], strides = [1, 1]} : vector<2x512xf32> to vector<2x128xf32>
    %cst_72 = arith.constant 5.000000e-01 : f32
    %169 = vector.broadcast %cst_72 : f32 to vector<2x128xf32>
    %170 = arith.mulf %169, %168 : vector<2x128xf32>
    %171 = math.tanh %170 : vector<2x128xf32>
    %cst_73 = arith.constant 5.000000e-01 : f32
    %172 = vector.broadcast %cst_73 : f32 to vector<2x128xf32>
    %173 = arith.mulf %172, %171 : vector<2x128xf32>
    %cst_74 = arith.constant 5.000000e-01 : f32
    %174 = vector.broadcast %cst_74 : f32 to vector<2x128xf32>
    %175 = arith.addf %173, %174 : vector<2x128xf32>
    %176 = vector.extract_strided_slice %159 {offsets = [0, 256], sizes = [2, 128], strides = [1, 1]} : vector<2x512xf32> to vector<2x128xf32>
    %177 = math.tanh %176 : vector<2x128xf32>
    %178 = vector.extract_strided_slice %159 {offsets = [0, 384], sizes = [2, 128], strides = [1, 1]} : vector<2x512xf32> to vector<2x128xf32>
    %cst_75 = arith.constant 5.000000e-01 : f32
    %179 = vector.broadcast %cst_75 : f32 to vector<2x128xf32>
    %180 = arith.mulf %179, %178 : vector<2x128xf32>
    %181 = math.tanh %180 : vector<2x128xf32>
    %cst_76 = arith.constant 5.000000e-01 : f32
    %182 = vector.broadcast %cst_76 : f32 to vector<2x128xf32>
    %183 = arith.mulf %182, %181 : vector<2x128xf32>
    %cst_77 = arith.constant 5.000000e-01 : f32
    %184 = vector.broadcast %cst_77 : f32 to vector<2x128xf32>
    %185 = arith.addf %183, %184 : vector<2x128xf32>
    %186 = arith.mulf %175, %141 : vector<2x128xf32>
    %187 = arith.mulf %167, %177 : vector<2x128xf32>
    %188 = arith.addf %186, %187 : vector<2x128xf32>
    %189 = math.tanh %188 : vector<2x128xf32>
    %190 = arith.mulf %185, %189 : vector<2x128xf32>
    %191 = arith.truncf %190 : vector<2x128xf32> to vector<2x128xbf16>
    %cst_78 = arith.constant dense<0.000000e+00> : vector<2x128xf32>
    %192 = tpu.matmul %191, %6, %cst_78 {dimension_numbers = #tpu.dot_dimension_numbers<[1], [0], [0], [1], [0, 0, 1, 1], [], []>} : vector<2x128xbf16>, vector<128x128xbf16>, vector<2x128xf32> -> vector<2x128xf32>
    %193 = vector.broadcast %7 : vector<1x128xf32> to vector<2x128xf32>
    %194 = arith.addf %192, %193 : vector<2x128xf32>
    %c0_79 = arith.constant 0 : index
    %c3_80 = arith.constant 3 : index
    %c0_81 = arith.constant 0 : index
    %195 = vector.load %arg8[%c0_79, %c3_80, %c0_81] : memref<2x8x128xf32, #tpu.memory_space<vmem>>, vector<2x1x128xf32>
    %196 = vector.shape_cast %195 : vector<2x1x128xf32> to vector<2x128xf32>
    %197 = vector.shape_cast %194 : vector<2x128xf32> to vector<2x1x128xf32>
    tpu.vector_store %arg8[%c0_79, %c3_80, %c0_81], %197 {strides = array<i32>} : memref<2x8x128xf32, #tpu.memory_space<vmem>>, vector<2x1x128xf32>,
    %c0_82 = arith.constant 0 : index
    %c4 = arith.constant 4 : index
    %c0_83 = arith.constant 0 : index
    %198 = vector.load %arg2[%c0_82, %c4, %c0_83] : memref<2x8x16xf32, #tpu.memory_space<vmem>>, vector<2x1x16xf32>
    %199 = vector.shape_cast %198 : vector<2x1x16xf32> to vector<2x16xf32>
    %200 = arith.truncf %199 : vector<2x16xf32> to vector<2x16xbf16>
    %cst_84 = arith.constant dense<0.000000e+00> : vector<2x512xf32>
    %201 = tpu.matmul %200, %3, %cst_84 {dimension_numbers = #tpu.dot_dimension_numbers<[1], [0], [0], [1], [0, 0, 1, 1], [], []>} : vector<2x16xbf16>, vector<16x512xbf16>, vector<2x512xf32> -> vector<2x512xf32>
    %202 = arith.truncf %190 : vector<2x128xf32> to vector<2x128xbf16>
    %cst_85 = arith.constant dense<0.000000e+00> : vector<2x512xf32>
    %203 = tpu.matmul %202, %4, %cst_85 {dimension_numbers = #tpu.dot_dimension_numbers<[1], [0], [0], [1], [0, 0, 1, 1], [], []>} : vector<2x128xbf16>, vector<128x512xbf16>, vector<2x512xf32> -> vector<2x512xf32>
    %204 = arith.addf %201, %203 : vector<2x512xf32>
    %205 = vector.broadcast %5 : vector<1x512xf32> to vector<2x512xf32>
    %206 = arith.addf %204, %205 : vector<2x512xf32>
    %207 = vector.extract_strided_slice %206 {offsets = [0, 0], sizes = [2, 128], strides = [1, 1]} : vector<2x512xf32> to vector<2x128xf32>
    %cst_86 = arith.constant 5.000000e-01 : f32
    %208 = vector.broadcast %cst_86 : f32 to vector<2x128xf32>
    %209 = arith.mulf %208, %207 : vector<2x128xf32>
    %210 = math.tanh %209 : vector<2x128xf32>
    %cst_87 = arith.constant 5.000000e-01 : f32
    %211 = vector.broadcast %cst_87 : f32 to vector<2x128xf32>
    %212 = arith.mulf %211, %210 : vector<2x128xf32>
    %cst_88 = arith.constant 5.000000e-01 : f32
    %213 = vector.broadcast %cst_88 : f32 to vector<2x128xf32>
    %214 = arith.addf %212, %213 : vector<2x128xf32>
    %215 = vector.extract_strided_slice %206 {offsets = [0, 128], sizes = [2, 128], strides = [1, 1]} : vector<2x512xf32> to vector<2x128xf32>
    %cst_89 = arith.constant 5.000000e-01 : f32
    %216 = vector.broadcast %cst_89 : f32 to vector<2x128xf32>
    %217 = arith.mulf %216, %215 : vector<2x128xf32>
    %218 = math.tanh %217 : vector<2x128xf32>
    %cst_90 = arith.constant 5.000000e-01 : f32
    %219 = vector.broadcast %cst_90 : f32 to vector<2x128xf32>
    %220 = arith.mulf %219, %218 : vector<2x128xf32>
    %cst_91 = arith.constant 5.000000e-01 : f32
    %221 = vector.broadcast %cst_91 : f32 to vector<2x128xf32>
    %222 = arith.addf %220, %221 : vector<2x128xf32>
    %223 = vector.extract_strided_slice %206 {offsets = [0, 256], sizes = [2, 128], strides = [1, 1]} : vector<2x512xf32> to vector<2x128xf32>
    %224 = math.tanh %223 : vector<2x128xf32>
    %225 = vector.extract_strided_slice %206 {offsets = [0, 384], sizes = [2, 128], strides = [1, 1]} : vector<2x512xf32> to vector<2x128xf32>
    %cst_92 = arith.constant 5.000000e-01 : f32
    %226 = vector.broadcast %cst_92 : f32 to vector<2x128xf32>
    %227 = arith.mulf %226, %225 : vector<2x128xf32>
    %228 = math.tanh %227 : vector<2x128xf32>
    %cst_93 = arith.constant 5.000000e-01 : f32
    %229 = vector.broadcast %cst_93 : f32 to vector<2x128xf32>
    %230 = arith.mulf %229, %228 : vector<2x128xf32>
    %cst_94 = arith.constant 5.000000e-01 : f32
    %231 = vector.broadcast %cst_94 : f32 to vector<2x128xf32>
    %232 = arith.addf %230, %231 : vector<2x128xf32>
    %233 = arith.mulf %222, %188 : vector<2x128xf32>
    %234 = arith.mulf %214, %224 : vector<2x128xf32>
    %235 = arith.addf %233, %234 : vector<2x128xf32>
    %236 = math.tanh %235 : vector<2x128xf32>
    %237 = arith.mulf %232, %236 : vector<2x128xf32>
    %238 = arith.truncf %237 : vector<2x128xf32> to vector<2x128xbf16>
    %cst_95 = arith.constant dense<0.000000e+00> : vector<2x128xf32>
    %239 = tpu.matmul %238, %6, %cst_95 {dimension_numbers = #tpu.dot_dimension_numbers<[1], [0], [0], [1], [0, 0, 1, 1], [], []>} : vector<2x128xbf16>, vector<128x128xbf16>, vector<2x128xf32> -> vector<2x128xf32>
    %240 = vector.broadcast %7 : vector<1x128xf32> to vector<2x128xf32>
    %241 = arith.addf %239, %240 : vector<2x128xf32>
    %c0_96 = arith.constant 0 : index
    %c4_97 = arith.constant 4 : index
    %c0_98 = arith.constant 0 : index
    %242 = vector.load %arg8[%c0_96, %c4_97, %c0_98] : memref<2x8x128xf32, #tpu.memory_space<vmem>>, vector<2x1x128xf32>
    %243 = vector.shape_cast %242 : vector<2x1x128xf32> to vector<2x128xf32>
    %244 = vector.shape_cast %241 : vector<2x128xf32> to vector<2x1x128xf32>
    tpu.vector_store %arg8[%c0_96, %c4_97, %c0_98], %244 {strides = array<i32>} : memref<2x8x128xf32, #tpu.memory_space<vmem>>, vector<2x1x128xf32>,
    %c0_99 = arith.constant 0 : index
    %c5 = arith.constant 5 : index
    %c0_100 = arith.constant 0 : index
    %245 = vector.load %arg2[%c0_99, %c5, %c0_100] : memref<2x8x16xf32, #tpu.memory_space<vmem>>, vector<2x1x16xf32>
    %246 = vector.shape_cast %245 : vector<2x1x16xf32> to vector<2x16xf32>
    %247 = arith.truncf %246 : vector<2x16xf32> to vector<2x16xbf16>
    %cst_101 = arith.constant dense<0.000000e+00> : vector<2x512xf32>
    %248 = tpu.matmul %247, %3, %cst_101 {dimension_numbers = #tpu.dot_dimension_numbers<[1], [0], [0], [1], [0, 0, 1, 1], [], []>} : vector<2x16xbf16>, vector<16x512xbf16>, vector<2x512xf32> -> vector<2x512xf32>
    %249 = arith.truncf %237 : vector<2x128xf32> to vector<2x128xbf16>
    %cst_102 = arith.constant dense<0.000000e+00> : vector<2x512xf32>
    %250 = tpu.matmul %249, %4, %cst_102 {dimension_numbers = #tpu.dot_dimension_numbers<[1], [0], [0], [1], [0, 0, 1, 1], [], []>} : vector<2x128xbf16>, vector<128x512xbf16>, vector<2x512xf32> -> vector<2x512xf32>
    %251 = arith.addf %248, %250 : vector<2x512xf32>
    %252 = vector.broadcast %5 : vector<1x512xf32> to vector<2x512xf32>
    %253 = arith.addf %251, %252 : vector<2x512xf32>
    %254 = vector.extract_strided_slice %253 {offsets = [0, 0], sizes = [2, 128], strides = [1, 1]} : vector<2x512xf32> to vector<2x128xf32>
    %cst_103 = arith.constant 5.000000e-01 : f32
    %255 = vector.broadcast %cst_103 : f32 to vector<2x128xf32>
    %256 = arith.mulf %255, %254 : vector<2x128xf32>
    %257 = math.tanh %256 : vector<2x128xf32>
    %cst_104 = arith.constant 5.000000e-01 : f32
    %258 = vector.broadcast %cst_104 : f32 to vector<2x128xf32>
    %259 = arith.mulf %258, %257 : vector<2x128xf32>
    %cst_105 = arith.constant 5.000000e-01 : f32
    %260 = vector.broadcast %cst_105 : f32 to vector<2x128xf32>
    %261 = arith.addf %259, %260 : vector<2x128xf32>
    %262 = vector.extract_strided_slice %253 {offsets = [0, 128], sizes = [2, 128], strides = [1, 1]} : vector<2x512xf32> to vector<2x128xf32>
    %cst_106 = arith.constant 5.000000e-01 : f32
    %263 = vector.broadcast %cst_106 : f32 to vector<2x128xf32>
    %264 = arith.mulf %263, %262 : vector<2x128xf32>
    %265 = math.tanh %264 : vector<2x128xf32>
    %cst_107 = arith.constant 5.000000e-01 : f32
    %266 = vector.broadcast %cst_107 : f32 to vector<2x128xf32>
    %267 = arith.mulf %266, %265 : vector<2x128xf32>
    %cst_108 = arith.constant 5.000000e-01 : f32
    %268 = vector.broadcast %cst_108 : f32 to vector<2x128xf32>
    %269 = arith.addf %267, %268 : vector<2x128xf32>
    %270 = vector.extract_strided_slice %253 {offsets = [0, 256], sizes = [2, 128], strides = [1, 1]} : vector<2x512xf32> to vector<2x128xf32>
    %271 = math.tanh %270 : vector<2x128xf32>
    %272 = vector.extract_strided_slice %253 {offsets = [0, 384], sizes = [2, 128], strides = [1, 1]} : vector<2x512xf32> to vector<2x128xf32>
    %cst_109 = arith.constant 5.000000e-01 : f32
    %273 = vector.broadcast %cst_109 : f32 to vector<2x128xf32>
    %274 = arith.mulf %273, %272 : vector<2x128xf32>
    %275 = math.tanh %274 : vector<2x128xf32>
    %cst_110 = arith.constant 5.000000e-01 : f32
    %276 = vector.broadcast %cst_110 : f32 to vector<2x128xf32>
    %277 = arith.mulf %276, %275 : vector<2x128xf32>
    %cst_111 = arith.constant 5.000000e-01 : f32
    %278 = vector.broadcast %cst_111 : f32 to vector<2x128xf32>
    %279 = arith.addf %277, %278 : vector<2x128xf32>
    %280 = arith.mulf %269, %235 : vector<2x128xf32>
    %281 = arith.mulf %261, %271 : vector<2x128xf32>
    %282 = arith.addf %280, %281 : vector<2x128xf32>
    %283 = math.tanh %282 : vector<2x128xf32>
    %284 = arith.mulf %279, %283 : vector<2x128xf32>
    %285 = arith.truncf %284 : vector<2x128xf32> to vector<2x128xbf16>
    %cst_112 = arith.constant dense<0.000000e+00> : vector<2x128xf32>
    %286 = tpu.matmul %285, %6, %cst_112 {dimension_numbers = #tpu.dot_dimension_numbers<[1], [0], [0], [1], [0, 0, 1, 1], [], []>} : vector<2x128xbf16>, vector<128x128xbf16>, vector<2x128xf32> -> vector<2x128xf32>
    %287 = vector.broadcast %7 : vector<1x128xf32> to vector<2x128xf32>
    %288 = arith.addf %286, %287 : vector<2x128xf32>
    %c0_113 = arith.constant 0 : index
    %c5_114 = arith.constant 5 : index
    %c0_115 = arith.constant 0 : index
    %289 = vector.load %arg8[%c0_113, %c5_114, %c0_115] : memref<2x8x128xf32, #tpu.memory_space<vmem>>, vector<2x1x128xf32>
    %290 = vector.shape_cast %289 : vector<2x1x128xf32> to vector<2x128xf32>
    %291 = vector.shape_cast %288 : vector<2x128xf32> to vector<2x1x128xf32>
    tpu.vector_store %arg8[%c0_113, %c5_114, %c0_115], %291 {strides = array<i32>} : memref<2x8x128xf32, #tpu.memory_space<vmem>>, vector<2x1x128xf32>,
    %c0_116 = arith.constant 0 : index
    %c6 = arith.constant 6 : index
    %c0_117 = arith.constant 0 : index
    %292 = vector.load %arg2[%c0_116, %c6, %c0_117] : memref<2x8x16xf32, #tpu.memory_space<vmem>>, vector<2x1x16xf32>
    %293 = vector.shape_cast %292 : vector<2x1x16xf32> to vector<2x16xf32>
    %294 = arith.truncf %293 : vector<2x16xf32> to vector<2x16xbf16>
    %cst_118 = arith.constant dense<0.000000e+00> : vector<2x512xf32>
    %295 = tpu.matmul %294, %3, %cst_118 {dimension_numbers = #tpu.dot_dimension_numbers<[1], [0], [0], [1], [0, 0, 1, 1], [], []>} : vector<2x16xbf16>, vector<16x512xbf16>, vector<2x512xf32> -> vector<2x512xf32>
    %296 = arith.truncf %284 : vector<2x128xf32> to vector<2x128xbf16>
    %cst_119 = arith.constant dense<0.000000e+00> : vector<2x512xf32>
    %297 = tpu.matmul %296, %4, %cst_119 {dimension_numbers = #tpu.dot_dimension_numbers<[1], [0], [0], [1], [0, 0, 1, 1], [], []>} : vector<2x128xbf16>, vector<128x512xbf16>, vector<2x512xf32> -> vector<2x512xf32>
    %298 = arith.addf %295, %297 : vector<2x512xf32>
    %299 = vector.broadcast %5 : vector<1x512xf32> to vector<2x512xf32>
    %300 = arith.addf %298, %299 : vector<2x512xf32>
    %301 = vector.extract_strided_slice %300 {offsets = [0, 0], sizes = [2, 128], strides = [1, 1]} : vector<2x512xf32> to vector<2x128xf32>
    %cst_120 = arith.constant 5.000000e-01 : f32
    %302 = vector.broadcast %cst_120 : f32 to vector<2x128xf32>
    %303 = arith.mulf %302, %301 : vector<2x128xf32>
    %304 = math.tanh %303 : vector<2x128xf32>
    %cst_121 = arith.constant 5.000000e-01 : f32
    %305 = vector.broadcast %cst_121 : f32 to vector<2x128xf32>
    %306 = arith.mulf %305, %304 : vector<2x128xf32>
    %cst_122 = arith.constant 5.000000e-01 : f32
    %307 = vector.broadcast %cst_122 : f32 to vector<2x128xf32>
    %308 = arith.addf %306, %307 : vector<2x128xf32>
    %309 = vector.extract_strided_slice %300 {offsets = [0, 128], sizes = [2, 128], strides = [1, 1]} : vector<2x512xf32> to vector<2x128xf32>
    %cst_123 = arith.constant 5.000000e-01 : f32
    %310 = vector.broadcast %cst_123 : f32 to vector<2x128xf32>
    %311 = arith.mulf %310, %309 : vector<2x128xf32>
    %312 = math.tanh %311 : vector<2x128xf32>
    %cst_124 = arith.constant 5.000000e-01 : f32
    %313 = vector.broadcast %cst_124 : f32 to vector<2x128xf32>
    %314 = arith.mulf %313, %312 : vector<2x128xf32>
    %cst_125 = arith.constant 5.000000e-01 : f32
    %315 = vector.broadcast %cst_125 : f32 to vector<2x128xf32>
    %316 = arith.addf %314, %315 : vector<2x128xf32>
    %317 = vector.extract_strided_slice %300 {offsets = [0, 256], sizes = [2, 128], strides = [1, 1]} : vector<2x512xf32> to vector<2x128xf32>
    %318 = math.tanh %317 : vector<2x128xf32>
    %319 = vector.extract_strided_slice %300 {offsets = [0, 384], sizes = [2, 128], strides = [1, 1]} : vector<2x512xf32> to vector<2x128xf32>
    %cst_126 = arith.constant 5.000000e-01 : f32
    %320 = vector.broadcast %cst_126 : f32 to vector<2x128xf32>
    %321 = arith.mulf %320, %319 : vector<2x128xf32>
    %322 = math.tanh %321 : vector<2x128xf32>
    %cst_127 = arith.constant 5.000000e-01 : f32
    %323 = vector.broadcast %cst_127 : f32 to vector<2x128xf32>
    %324 = arith.mulf %323, %322 : vector<2x128xf32>
    %cst_128 = arith.constant 5.000000e-01 : f32
    %325 = vector.broadcast %cst_128 : f32 to vector<2x128xf32>
    %326 = arith.addf %324, %325 : vector<2x128xf32>
    %327 = arith.mulf %316, %282 : vector<2x128xf32>
    %328 = arith.mulf %308, %318 : vector<2x128xf32>
    %329 = arith.addf %327, %328 : vector<2x128xf32>
    %330 = math.tanh %329 : vector<2x128xf32>
    %331 = arith.mulf %326, %330 : vector<2x128xf32>
    %332 = arith.truncf %331 : vector<2x128xf32> to vector<2x128xbf16>
    %cst_129 = arith.constant dense<0.000000e+00> : vector<2x128xf32>
    %333 = tpu.matmul %332, %6, %cst_129 {dimension_numbers = #tpu.dot_dimension_numbers<[1], [0], [0], [1], [0, 0, 1, 1], [], []>} : vector<2x128xbf16>, vector<128x128xbf16>, vector<2x128xf32> -> vector<2x128xf32>
    %334 = vector.broadcast %7 : vector<1x128xf32> to vector<2x128xf32>
    %335 = arith.addf %333, %334 : vector<2x128xf32>
    %c0_130 = arith.constant 0 : index
    %c6_131 = arith.constant 6 : index
    %c0_132 = arith.constant 0 : index
    %336 = vector.load %arg8[%c0_130, %c6_131, %c0_132] : memref<2x8x128xf32, #tpu.memory_space<vmem>>, vector<2x1x128xf32>
    %337 = vector.shape_cast %336 : vector<2x1x128xf32> to vector<2x128xf32>
    %338 = vector.shape_cast %335 : vector<2x128xf32> to vector<2x1x128xf32>
    tpu.vector_store %arg8[%c0_130, %c6_131, %c0_132], %338 {strides = array<i32>} : memref<2x8x128xf32, #tpu.memory_space<vmem>>, vector<2x1x128xf32>,
    %c0_133 = arith.constant 0 : index
    %c7 = arith.constant 7 : index
    %c0_134 = arith.constant 0 : index
    %339 = vector.load %arg2[%c0_133, %c7, %c0_134] : memref<2x8x16xf32, #tpu.memory_space<vmem>>, vector<2x1x16xf32>
    %340 = vector.shape_cast %339 : vector<2x1x16xf32> to vector<2x16xf32>
    %341 = arith.truncf %340 : vector<2x16xf32> to vector<2x16xbf16>
    %cst_135 = arith.constant dense<0.000000e+00> : vector<2x512xf32>
    %342 = tpu.matmul %341, %3, %cst_135 {dimension_numbers = #tpu.dot_dimension_numbers<[1], [0], [0], [1], [0, 0, 1, 1], [], []>} : vector<2x16xbf16>, vector<16x512xbf16>, vector<2x512xf32> -> vector<2x512xf32>
    %343 = arith.truncf %331 : vector<2x128xf32> to vector<2x128xbf16>
    %cst_136 = arith.constant dense<0.000000e+00> : vector<2x512xf32>
    %344 = tpu.matmul %343, %4, %cst_136 {dimension_numbers = #tpu.dot_dimension_numbers<[1], [0], [0], [1], [0, 0, 1, 1], [], []>} : vector<2x128xbf16>, vector<128x512xbf16>, vector<2x512xf32> -> vector<2x512xf32>
    %345 = arith.addf %342, %344 : vector<2x512xf32>
    %346 = vector.broadcast %5 : vector<1x512xf32> to vector<2x512xf32>
    %347 = arith.addf %345, %346 : vector<2x512xf32>
    %348 = vector.extract_strided_slice %347 {offsets = [0, 0], sizes = [2, 128], strides = [1, 1]} : vector<2x512xf32> to vector<2x128xf32>
    %cst_137 = arith.constant 5.000000e-01 : f32
    %349 = vector.broadcast %cst_137 : f32 to vector<2x128xf32>
    %350 = arith.mulf %349, %348 : vector<2x128xf32>
    %351 = math.tanh %350 : vector<2x128xf32>
    %cst_138 = arith.constant 5.000000e-01 : f32
    %352 = vector.broadcast %cst_138 : f32 to vector<2x128xf32>
    %353 = arith.mulf %352, %351 : vector<2x128xf32>
    %cst_139 = arith.constant 5.000000e-01 : f32
    %354 = vector.broadcast %cst_139 : f32 to vector<2x128xf32>
    %355 = arith.addf %353, %354 : vector<2x128xf32>
    %356 = vector.extract_strided_slice %347 {offsets = [0, 128], sizes = [2, 128], strides = [1, 1]} : vector<2x512xf32> to vector<2x128xf32>
    %cst_140 = arith.constant 5.000000e-01 : f32
    %357 = vector.broadcast %cst_140 : f32 to vector<2x128xf32>
    %358 = arith.mulf %357, %356 : vector<2x128xf32>
    %359 = math.tanh %358 : vector<2x128xf32>
    %cst_141 = arith.constant 5.000000e-01 : f32
    %360 = vector.broadcast %cst_141 : f32 to vector<2x128xf32>
    %361 = arith.mulf %360, %359 : vector<2x128xf32>
    %cst_142 = arith.constant 5.000000e-01 : f32
    %362 = vector.broadcast %cst_142 : f32 to vector<2x128xf32>
    %363 = arith.addf %361, %362 : vector<2x128xf32>
    %364 = vector.extract_strided_slice %347 {offsets = [0, 256], sizes = [2, 128], strides = [1, 1]} : vector<2x512xf32> to vector<2x128xf32>
    %365 = math.tanh %364 : vector<2x128xf32>
    %366 = vector.extract_strided_slice %347 {offsets = [0, 384], sizes = [2, 128], strides = [1, 1]} : vector<2x512xf32> to vector<2x128xf32>
    %cst_143 = arith.constant 5.000000e-01 : f32
    %367 = vector.broadcast %cst_143 : f32 to vector<2x128xf32>
    %368 = arith.mulf %367, %366 : vector<2x128xf32>
    %369 = math.tanh %368 : vector<2x128xf32>
    %cst_144 = arith.constant 5.000000e-01 : f32
    %370 = vector.broadcast %cst_144 : f32 to vector<2x128xf32>
    %371 = arith.mulf %370, %369 : vector<2x128xf32>
    %cst_145 = arith.constant 5.000000e-01 : f32
    %372 = vector.broadcast %cst_145 : f32 to vector<2x128xf32>
    %373 = arith.addf %371, %372 : vector<2x128xf32>
    %374 = arith.mulf %363, %329 : vector<2x128xf32>
    %375 = arith.mulf %355, %365 : vector<2x128xf32>
    %376 = arith.addf %374, %375 : vector<2x128xf32>
    %377 = math.tanh %376 : vector<2x128xf32>
    %378 = arith.mulf %373, %377 : vector<2x128xf32>
    %379 = arith.truncf %378 : vector<2x128xf32> to vector<2x128xbf16>
    %cst_146 = arith.constant dense<0.000000e+00> : vector<2x128xf32>
    %380 = tpu.matmul %379, %6, %cst_146 {dimension_numbers = #tpu.dot_dimension_numbers<[1], [0], [0], [1], [0, 0, 1, 1], [], []>} : vector<2x128xbf16>, vector<128x128xbf16>, vector<2x128xf32> -> vector<2x128xf32>
    %381 = vector.broadcast %7 : vector<1x128xf32> to vector<2x128xf32>
    %382 = arith.addf %380, %381 : vector<2x128xf32>
    %c0_147 = arith.constant 0 : index
    %c7_148 = arith.constant 7 : index
    %c0_149 = arith.constant 0 : index
    %383 = vector.load %arg8[%c0_147, %c7_148, %c0_149] : memref<2x8x128xf32, #tpu.memory_space<vmem>>, vector<2x1x128xf32>
    %384 = vector.shape_cast %383 : vector<2x1x128xf32> to vector<2x128xf32>
    %385 = vector.shape_cast %382 : vector<2x128xf32> to vector<2x1x128xf32>
    tpu.vector_store %arg8[%c0_147, %c7_148, %c0_149], %385 {strides = array<i32>} : memref<2x8x128xf32, #tpu.memory_space<vmem>>, vector<2x1x128xf32>,
    %c0_150 = arith.constant 0 : index
    %c0_151 = arith.constant 0 : index
    %386 = vector.load %arg9[%c0_150, %c0_151] : memref<2x128xf32, #tpu.memory_space<vmem>>, vector<2x128xf32>
    tpu.vector_store %arg9[%c0_150, %c0_151], %378 {strides = array<i32>} : memref<2x128xf32, #tpu.memory_space<vmem>>, vector<2x128xf32>,
    %c0_152 = arith.constant 0 : index
    %c0_153 = arith.constant 0 : index
    %387 = vector.load %arg10[%c0_152, %c0_153] : memref<2x128xf32, #tpu.memory_space<vmem>>, vector<2x128xf32>
    tpu.vector_store %arg10[%c0_152, %c0_153], %376 {strides = array<i32>} : memref<2x128xf32, #tpu.memory_space<vmem>>, vector<2x128xf32>,
    return
  }
  func.func @transform_0(%arg0: i32, %arg1: i32) -> (i32, i32, i32) {
    %c0_i32 = arith.constant 0 : i32
    %c0_i32_0 = arith.constant 0 : i32
    return %arg0, %arg1, %c0_i32 : i32, i32, i32
  }
  func.func @transform_1(%arg0: i32, %arg1: i32) -> (i32, i32) {
    %c0_i32 = arith.constant 0 : i32
    %c0_i32_0 = arith.constant 0 : i32
    %c0_i32_1 = arith.constant 0 : i32
    return %c0_i32, %c0_i32_0 : i32, i32
  }
  func.func @transform_2(%arg0: i32, %arg1: i32) -> (i32, i32) {
    %c0_i32 = arith.constant 0 : i32
    %c0_i32_0 = arith.constant 0 : i32
    %c0_i32_1 = arith.constant 0 : i32
    return %c0_i32, %c0_i32_0 : i32, i32
  }
  func.func @transform_3(%arg0: i32, %arg1: i32) -> (i32, i32) {
    %c0_i32 = arith.constant 0 : i32
    %c0_i32_0 = arith.constant 0 : i32
    %c0_i32_1 = arith.constant 0 : i32
    return %c0_i32, %c0_i32_0 : i32, i32
  }
  func.func @transform_4(%arg0: i32, %arg1: i32) -> (i32, i32) {
    %c0_i32 = arith.constant 0 : i32
    %c0_i32_0 = arith.constant 0 : i32
    %c0_i32_1 = arith.constant 0 : i32
    return %c0_i32, %c0_i32_0 : i32, i32
  }
  func.func @transform_5(%arg0: i32, %arg1: i32) -> (i32, i32) {
    %c0_i32 = arith.constant 0 : i32
    %c0_i32_0 = arith.constant 0 : i32
    %c0_i32_1 = arith.constant 0 : i32
    return %c0_i32, %c0_i32_0 : i32, i32
  }
  func.func @transform_6(%arg0: i32, %arg1: i32) -> (i32, i32, i32) {
    %c0_i32 = arith.constant 0 : i32
    %c0_i32_0 = arith.constant 0 : i32
    return %arg0, %arg1, %c0_i32 : i32, i32, i32
  }
}

</mosaic_0001>

<llo_original>
// kernel: lstm_with_linear.1
$region0: #{lstm_with_linear.1}
  #allocation0 [shape = 'u32[]', space=smem, size = 0x4, offset = 0x4, fixed_abs, tag = 'smem constant byte address 0x4 - core index']
  #allocation1 [shape = 'u32[72,128]{1,0:T(1,128)}', space=vmem, size = 0x9000, scoped, tag = 'internal scratch']
  #allocation2 [shape = 'f32[2,128]{1,0:T(2,128)}', space=vmem, size = 0x400, scoped, tag = 'scratch operand']
  #allocation3 [shape = 'f32[2,128]{1,0:T(2,128)}', space=vmem, size = 0x400, scoped, tag = 'scratch operand']
  %s0 = inlined_call_operand.vmem [shape: f32[2,8,16], index: 0, kind: input, shape index: {}]
  %s1 = inlined_call_operand.vmem [shape: bf16[16,512], index: 1, kind: input, shape index: {}]
  %s2 = inlined_call_operand.vmem [shape: bf16[128,512], index: 2, kind: input, shape index: {}]
  %s3 = inlined_call_operand.vmem [shape: f32[1,512], index: 3, kind: input, shape index: {}]
  %s4 = inlined_call_operand.vmem [shape: bf16[128,128], index: 4, kind: input, shape index: {}]
  %s5 = inlined_call_operand.vmem [shape: f32[1,128], index: 5, kind: input, shape index: {}]
  %s6 = inlined_call_operand.hbm [shape: f32[2,8,128], index: 6, kind: output, shape index: {}]
  %s7 = sld [smem:[#allocation0]]
  $region38: #{lstm_with_linear.1} parent=0
    _
  %s9 = ssub.s32 1, %s7
  %s10 = scalar_select 0, %s9, %s7
  $region1: #{lstm_with_linear.1} parent=0
    #allocation4 [shape = 'u8[8192]{0}', space=vmem, size = 0x2000, scoped, tag = 'output window, operand 0, single buffered']
    #allocation5 [shape = 's32[1]{0}', space=sflag, size = 0x4, scoped, tag = 'scoped memory for lstm_with_linear.1']
    %11 = vsyncpa [#allocation5], 0
    // Predicated region
    $region2: #{lstm_with_linear.1} parent=1 // pred_check
      _
    $region3: #{lstm_with_linear.1} parent=1 // pred_check_branch
      %13 = sbr.rel (0) target = $region5
    $region4: #{lstm_with_linear.1} parent=1 // pred_region
      _
    $region5: #{lstm_with_linear.1} parent=1 // pred_fallthru
      _
    // Predicated region
    $region6: #{lstm_with_linear.1} parent=1 // pred_check
      _
    $region7: #{lstm_with_linear.1} parent=1 // pred_check_branch
      %15 = sbr.rel (0) target = $region9
    $region8: #{lstm_with_linear.1} parent=1 // pred_region
      _
    $region9: #{lstm_with_linear.1} parent=1 // pred_fallthru
      _
    // Predicated region
    $region10: #{lstm_with_linear.1} parent=1 // pred_check
      _
    $region11: #{lstm_with_linear.1} parent=1 // pred_check_branch
      %17 = sbr.rel (0) target = $region13
    $region12: #{lstm_with_linear.1} parent=1 // pred_region
      _
    $region13: #{lstm_with_linear.1} parent=1 // pred_fallthru
      _
    // Predicated region
    $region14: #{lstm_with_linear.1} parent=1 // pred_check
      _
    $region15: #{lstm_with_linear.1} parent=1 // pred_check_branch
      %19 = sbr.rel (0) target = $region17
    $region16: #{lstm_with_linear.1} parent=1 // pred_region
      _
    $region17: #{lstm_with_linear.1} parent=1 // pred_fallthru
      _
    // Predicated region
    $region18: #{lstm_with_linear.1} parent=1 // pred_check
      _
    $region19: #{lstm_with_linear.1} parent=1 // pred_check_branch
      %21 = sbr.rel (0) target = $region21
    $region20: #{lstm_with_linear.1} parent=1 // pred_region
      _
    $region21: #{lstm_with_linear.1} parent=1 // pred_fallthru
      _
    // Predicated region
    $region22: #{lstm_with_linear.1} parent=1 // pred_check
      _
    $region23: #{lstm_with_linear.1} parent=1 // pred_check_branch
      %23 = sbr.rel (0) target = $region25
    $region24: #{lstm_with_linear.1} parent=1 // pred_region
      _
    $region25: #{lstm_with_linear.1} parent=1 // pred_fallthru
      _
    %p25 = scmp.eq.s32.totalorder 0, 0
    // Predicated region
    $region26: #{lstm_with_linear.1} parent=1 // pred_check
      %p26 = pneg %p25
    $region27: #{lstm_with_linear.1} parent=1 // pred_check_branch
      %28 = sbr.rel (%p26) target = $region29
    $region28: #{lstm_with_linear.1} parent=1 // pred_region
      %29 = vst [vmem:[#allocation2] sm:$0x3] 0.0
      %30 = vst [vmem:[#allocation3] sm:$0x3] 0.0
    $region29: #{lstm_with_linear.1} parent=1 // pred_fallthru
      _
    %v31 = vld [vmem:[%s1] sm:$0xff]
    %v32 = vld [vmem:[%s1 + $0x8] sm:$0xff]
    %v33 = vld [vmem:[%s1 + $0x10] sm:$0xff]
    %v34 = vld [vmem:[%s1 + $0x18] sm:$0xff]
    %v35 = vld [vmem:[%s2] sm:$0xff]
    %v36 = vld [vmem:[%s2 + $0x8] sm:$0xff]
    %v37 = vld [vmem:[%s2 + $0x10] sm:$0xff]
    %v38 = vld [vmem:[%s2 + $0x18] sm:$0xff]
    %v39 = vld [vmem:[%s2 + $0x20] sm:$0xff]
    %v40 = vld [vmem:[%s2 + $0x28] sm:$0xff]
    %v41 = vld [vmem:[%s2 + $0x30] sm:$0xff]
    %v42 = vld [vmem:[%s2 + $0x38] sm:$0xff]
    %v43 = vld [vmem:[%s2 + $0x40] sm:$0xff]
    %v44 = vld [vmem:[%s2 + $0x48] sm:$0xff]
    %v45 = vld [vmem:[%s2 + $0x50] sm:$0xff]
    %v46 = vld [vmem:[%s2 + $0x58] sm:$0xff]
    %v47 = vld [vmem:[%s2 + $0x60] sm:$0xff]
    %v48 = vld [vmem:[%s2 + $0x68] sm:$0xff]
    %v49 = vld [vmem:[%s2 + $0x70] sm:$0xff]
    %v50 = vld [vmem:[%s2 + $0x78] sm:$0xff]
    %v51 = vld [vmem:[%s2 + $0x80] sm:$0xff]
    %v52 = vld [vmem:[%s2 + $0x88] sm:$0xff]
    %v53 = vld [vmem:[%s2 + $0x90] sm:$0xff]
    %v54 = vld [vmem:[%s2 + $0x98] sm:$0xff]
    %v55 = vld [vmem:[%s2 + $0xa0] sm:$0xff]
    %v56 = vld [vmem:[%s2 + $0xa8] sm:$0xff]
    %v57 = vld [vmem:[%s2 + $0xb0] sm:$0xff]
    %v58 = vld [vmem:[%s2 + $0xb8] sm:$0xff]
    %v59 = vld [vmem:[%s2 + $0xc0] sm:$0xff]
    %v60 = vld [vmem:[%s2 + $0xc8] sm:$0xff]
    %v61 = vld [vmem:[%s2 + $0xd0] sm:$0xff]
    %v62 = vld [vmem:[%s2 + $0xd8] sm:$0xff]
    %v63 = vld [vmem:[%s2 + $0xe0] sm:$0xff]
    %v64 = vld [vmem:[%s2 + $0xe8] sm:$0xff]
    %v65 = vld [vmem:[%s2 + $0xf0] sm:$0xff]
    %v66 = vld [vmem:[%s2 + $0xf8] sm:$0xff]
    %v67 = vld [vmem:[%s3] sm:$0xf]
    %v68 = vld [vmem:[%s4] sm:$0xf]
    %v69 = vld [vmem:[%s4 + $0x4] sm:$0xf]
    %v70 = vld [vmem:[%s4 + $0x8] sm:$0xf]
    %v71 = vld [vmem:[%s4 + $0xc] sm:$0xf]
    %v72 = vld [vmem:[%s4 + $0x10] sm:$0xf]
    %v73 = vld [vmem:[%s4 + $0x14] sm:$0xf]
    %v74 = vld [vmem:[%s4 + $0x18] sm:$0xf]
    %v75 = vld [vmem:[%s4 + $0x1c] sm:$0xf]
    %v76 = vld [vmem:[%s4 + $0x20] sm:$0xf]
    %v77 = vld [vmem:[%s4 + $0x24] sm:$0xf]
    %v78 = vld [vmem:[%s4 + $0x28] sm:$0xf]
    %v79 = vld [vmem:[%s4 + $0x2c] sm:$0xf]
    %v80 = vld [vmem:[%s4 + $0x30] sm:$0xf]
    %v81 = vld [vmem:[%s4 + $0x34] sm:$0xf]
    %v82 = vld [vmem:[%s4 + $0x38] sm:$0xf]
    %v83 = vld [vmem:[%s4 + $0x3c] sm:$0xf]
    %v84 = vld [vmem:[%s5] sm:$0x1]
    %v85 = vld [vmem:[#allocation2] sm:$0x3]
    %v86 = vld [vmem:[#allocation3] sm:$0x3]
    %v87 = vld [vmem:[%s0] sm:$0x1]
    %v88 = vld [vmem:[%s0 + $0x8] sm:$0x1]
    %v89 = vpack.c.bf16 %v87, %v87
    %v90 = vpack.c.bf16 %v88, %v88
    %v91 = vpack.c.bf16 %v85, %v85
    %v124 = vunpack.c.l.b16 %v35
    %v125 = vunpack.c.h.b16 %v35
    %v126 = vunpack.c.l.b16 %v36
    %v127 = vunpack.c.h.b16 %v36
    %v128 = vunpack.c.l.b16 %v37
    %v129 = vunpack.c.h.b16 %v37
    %v130 = vunpack.c.l.b16 %v38
    %v131 = vunpack.c.h.b16 %v38
    %v132 = vunpack.c.l.b16 %v39
    %v133 = vunpack.c.h.b16 %v39
    %v134 = vunpack.c.l.b16 %v40
    %v135 = vunpack.c.h.b16 %v40
    %v136 = vunpack.c.l.b16 %v41
    %v137 = vunpack.c.h.b16 %v41
    %v138 = vunpack.c.l.b16 %v42
    %v139 = vunpack.c.h.b16 %v42
    %v140 = vunpack.c.l.b16 %v43
    %v141 = vunpack.c.h.b16 %v43
    %v142 = vunpack.c.l.b16 %v44
    %v143 = vunpack.c.h.b16 %v44
    %v144 = vunpack.c.l.b16 %v45
    %v145 = vunpack.c.h.b16 %v45
    %v146 = vunpack.c.l.b16 %v46
    %v147 = vunpack.c.h.b16 %v46
    %v148 = vunpack.c.l.b16 %v47
    %v149 = vunpack.c.h.b16 %v47
    %v150 = vunpack.c.l.b16 %v48
    %v151 = vunpack.c.h.b16 %v48
    %v152 = vunpack.c.l.b16 %v49
    %v153 = vunpack.c.h.b16 %v49
    %v154 = vunpack.c.l.b16 %v50
    %v155 = vunpack.c.h.b16 %v50
    %v156 = vunpack.c.l.b16 %v51
    %v157 = vunpack.c.h.b16 %v51
    %v158 = vunpack.c.l.b16 %v52
    %v159 = vunpack.c.h.b16 %v52
    %v160 = vunpack.c.l.b16 %v53
    %v161 = vunpack.c.h.b16 %v53
    %v162 = vunpack.c.l.b16 %v54
    %v163 = vunpack.c.h.b16 %v54
    %v164 = vunpack.c.l.b16 %v55
    %v165 = vunpack.c.h.b16 %v55
    %v166 = vunpack.c.l.b16 %v56
    %v167 = vunpack.c.h.b16 %v56
    %v168 = vunpack.c.l.b16 %v57
    %v169 = vunpack.c.h.b16 %v57
    %v170 = vunpack.c.l.b16 %v58
    %v171 = vunpack.c.h.b16 %v58
    %v172 = vunpack.c.l.b16 %v59
    %v173 = vunpack.c.h.b16 %v59
    %v174 = vunpack.c.l.b16 %v60
    %v175 = vunpack.c.h.b16 %v60
    %v176 = vunpack.c.l.b16 %v61
    %v177 = vunpack.c.h.b16 %v61
    %v178 = vunpack.c.l.b16 %v62
    %v179 = vunpack.c.h.b16 %v62
    %v180 = vunpack.c.l.b16 %v63
    %v181 = vunpack.c.h.b16 %v63
    %v182 = vunpack.c.l.b16 %v64
    %v183 = vunpack.c.h.b16 %v64
    %v184 = vunpack.c.l.b16 %v65
    %v185 = vunpack.c.h.b16 %v65
    %v186 = vunpack.c.l.b16 %v66
    %v187 = vunpack.c.h.b16 %v66
    %v188 = vpack.c.b16 %v128, %v124
    %v189 = vpack.c.b16 %v129, %v125
    %v190 = vpack.c.b16 %v130, %v126
    %v191 = vpack.c.b16 %v131, %v127
    %v192 = vpack.c.b16 %v136, %v132
    %v193 = vpack.c.b16 %v137, %v133
    %v194 = vpack.c.b16 %v138, %v134
    %v195 = vpack.c.b16 %v139, %v135
    %v196 = vpack.c.b16 %v144, %v140
    %v197 = vpack.c.b16 %v145, %v141
    %v198 = vpack.c.b16 %v146, %v142
    %v199 = vpack.c.b16 %v147, %v143
    %v200 = vpack.c.b16 %v152, %v148
    %v201 = vpack.c.b16 %v153, %v149
    %v202 = vpack.c.b16 %v154, %v150
    %v203 = vpack.c.b16 %v155, %v151
    %v204 = vpack.c.b16 %v160, %v156
    %v205 = vpack.c.b16 %v161, %v157
    %v206 = vpack.c.b16 %v162, %v158
    %v207 = vpack.c.b16 %v163, %v159
    %v208 = vpack.c.b16 %v168, %v164
    %v209 = vpack.c.b16 %v169, %v165
    %v210 = vpack.c.b16 %v170, %v166
    %v211 = vpack.c.b16 %v171, %v167
    %v212 = vpack.c.b16 %v176, %v172
    %v213 = vpack.c.b16 %v177, %v173
    %v214 = vpack.c.b16 %v178, %v174
    %v215 = vpack.c.b16 %v179, %v175
    %v216 = vpack.c.b16 %v184, %v180
    %v217 = vpack.c.b16 %v185, %v181
    %v218 = vpack.c.b16 %v186, %v182
    %v219 = vpack.c.b16 %v187, %v183
    %252 = vmatpush.bf16.msra.mxu0 %v216
    %253 = vmatpush.bf16.msra.mxu0 %v212
    %254 = vmatpush.bf16.msra.mxu0 %v208
    %255 = vmatpush.bf16.msra.mxu0 %v204
    %256 = vmatpush.bf16.msra.mxu0 %v200
    %257 = vmatpush.bf16.msra.mxu0 %v196
    %258 = vmatpush.bf16.msra.mxu0 %v192
    %259 = vmatpush.bf16.msra.mxu0 %v188
    %260 = vmatmul.bf16.gmra.mxu0 %v91
    %v261 = vpop.f32.mrf.mxu0
    %v262 = vadd.f32 0.0, %v261
    %v263 = vpop.f32.mrf.mxu0
    %264 = vdwg.mxu0
    %265 = vmatpush.bf16.msra.mxu0 %v217
    %266 = vmatpush.bf16.msra.mxu0 %v213
    %267 = vmatpush.bf16.msra.mxu0 %v209
    %268 = vmatpush.bf16.msra.mxu0 %v205
    %269 = vmatpush.bf16.msra.mxu0 %v201
    %270 = vmatpush.bf16.msra.mxu0 %v197
    %271 = vmatpush.bf16.msra.mxu0 %v193
    %272 = vmatpush.bf16.msra.mxu0 %v189
    %273 = vmatmul.bf16.gmra.mxu0 %v91
    %v274 = vpop.f32.mrf.mxu0
    %v275 = vadd.f32 0.0, %v274
    %v276 = vpop.f32.mrf.mxu0
    %277 = vdwg.mxu0
    %278 = vmatpush.bf16.msra.mxu0 %v218
    %279 = vmatpush.bf16.msra.mxu0 %v214
    %280 = vmatpush.bf16.msra.mxu0 %v210
    %281 = vmatpush.bf16.msra.mxu0 %v206
    %282 = vmatpush.bf16.msra.mxu0 %v202
    %283 = vmatpush.bf16.msra.mxu0 %v198
    %284 = vmatpush.bf16.msra.mxu0 %v194
    %285 = vmatpush.bf16.msra.mxu0 %v190
    %286 = vmatmul.bf16.gmra.mxu0 %v91
    %v287 = vpop.f32.mrf.mxu0
    %v288 = vadd.f32 0.0, %v287
    %v289 = vpop.f32.mrf.mxu0
    %290 = vdwg.mxu0
    %291 = vmatpush.bf16.msra.mxu0 %v219
    %292 = vmatpush.bf16.msra.mxu0 %v215
    %293 = vmatpush.bf16.msra.mxu0 %v211
    %294 = vmatpush.bf16.msra.mxu0 %v207
    %295 = vmatpush.bf16.msra.mxu0 %v203
    %296 = vmatpush.bf16.msra.mxu0 %v199
    %297 = vmatpush.bf16.msra.mxu0 %v195
    %298 = vmatpush.bf16.msra.mxu0 %v191
    %299 = vmatmul.bf16.gmra.mxu0 %v91
    %v300 = vpop.f32.mrf.mxu0
    %v301 = vadd.f32 0.0, %v300
    %v302 = vpop.f32.mrf.mxu0
    %303 = vdwg.mxu0
    %v306 = vunpack.c.l.b16 %v89
    %v307 = vunpack.c.l.b16 %v90
    %v308 = vrot.slane %v307, 7
    %vm309 = vcmask 1041409
    %v310 = vsel %vm309, %v308, %v306
    %v311 = vpack.c.b16 %v310, %v310
    %v316 = vunpack.c.l.b16 %v31
    %v317 = vunpack.c.h.b16 %v31
    %v318 = vunpack.c.l.b16 %v32
    %v319 = vunpack.c.h.b16 %v32
    %v320 = vunpack.c.l.b16 %v33
    %v321 = vunpack.c.h.b16 %v33
    %v322 = vunpack.c.l.b16 %v34
    %v323 = vunpack.c.h.b16 %v34
    %v324 = vpack.c.b16 %v320, %v316
    %v325 = vpack.c.b16 %v321, %v317
    %v326 = vpack.c.b16 %v322, %v318
    %v327 = vpack.c.b16 %v323, %v319
    %vm332 = vcmask 130048
    %v334 = vsel %vm332, %v311, 0
    %336 = vmatpush.bf16.msra.mxu0 0
    %337 = vmatpush.bf16.msra.mxu0 0
    %338 = vmatpush.bf16.msra.mxu0 0
    %339 = vmatpush.bf16.msra.mxu0 0
    %340 = vmatpush.bf16.msra.mxu0 0
    %341 = vmatpush.bf16.msra.mxu0 0
    %342 = vmatpush.bf16.msra.mxu0 0
    %343 = vmatpush.bf16.msra.mxu0 %v324
    %344 = vmatmul.bf16.gmra.mxu0 %v334
    %v345 = vpop.f32.mrf.mxu0
    %v346 = vadd.f32 %v262, %v345
    %v347 = vpop.f32.mrf.mxu0
    %348 = vdwg.mxu0
    %349 = vmatpush.bf16.msra.mxu0 0
    %350 = vmatpush.bf16.msra.mxu0 0
    %351 = vmatpush.bf16.msra.mxu0 0
    %352 = vmatpush.bf16.msra.mxu0 0
    %353 = vmatpush.bf16.msra.mxu0 0
    %354 = vmatpush.bf16.msra.mxu0 0
    %355 = vmatpush.bf16.msra.mxu0 0
    %356 = vmatpush.bf16.msra.mxu0 %v325
    %357 = vmatmul.bf16.gmra.mxu0 %v334
    %v358 = vpop.f32.mrf.mxu0
    %v359 = vadd.f32 %v275, %v358
    %v360 = vpop.f32.mrf.mxu0
    %361 = vdwg.mxu0
    %362 = vmatpush.bf16.msra.mxu0 0
    %363 = vmatpush.bf16.msra.mxu0 0
    %364 = vmatpush.bf16.msra.mxu0 0
    %365 = vmatpush.bf16.msra.mxu0 0
    %366 = vmatpush.bf16.msra.mxu0 0
    %367 = vmatpush.bf16.msra.mxu0 0
    %368 = vmatpush.bf16.msra.mxu0 0
    %369 = vmatpush.bf16.msra.mxu0 %v326
    %370 = vmatmul.bf16.gmra.mxu0 %v334
    %v371 = vpop.f32.mrf.mxu0
    %v372 = vadd.f32 %v288, %v371
    %v373 = vpop.f32.mrf.mxu0
    %374 = vdwg.mxu0
    %375 = vmatpush.bf16.msra.mxu0 0
    %376 = vmatpush.bf16.msra.mxu0 0
    %377 = vmatpush.bf16.msra.mxu0 0
    %378 = vmatpush.bf16.msra.mxu0 0
    %379 = vmatpush.bf16.msra.mxu0 0
    %380 = vmatpush.bf16.msra.mxu0 0
    %381 = vmatpush.bf16.msra.mxu0 0
    %382 = vmatpush.bf16.msra.mxu0 %v327
    %383 = vmatmul.bf16.gmra.mxu0 %v334
    %v384 = vpop.f32.mrf.mxu0
    %v385 = vadd.f32 %v301, %v384
    %v386 = vpop.f32.mrf.mxu0
    %387 = vdwg.mxu0
    %v389 = vperm.slane %v67, 0
    %v390 = vperm.slane %v67, 1
    %v391 = vperm.slane %v67, 2
    %v392 = vperm.slane %v67, 3
    %v397 = vadd.f32 %v346, %v389
    %v398 = vadd.f32 %v359, %v390
    %v399 = vadd.f32 %v372, %v391
    %v400 = vadd.f32 %v385, %v392
    %v401 = vmul.f32 %v397, 0.5
    %v402 = vtanh.pop %v401
    %v403 = vmul.f32 %v402, 0.5
    %v404 = vadd.f32 %v403, 0.5
    %v405 = vmul.f32 %v398, 0.5
    %v406 = vtanh.pop %v405
    %v407 = vmul.f32 %v406, 0.5
    %v408 = vadd.f32 %v407, 0.5
    %v409 = vtanh.pop %v399
    %v410 = vmul.f32 %v400, 0.5
    %v411 = vtanh.pop %v410
    %v412 = vmul.f32 %v411, 0.5
    %v413 = vadd.f32 %v412, 0.5
    %v414 = vmul.f32 %v408, %v86
    %v415 = vmul.f32 %v404, %v409
    %v416 = vadd.f32 %v414, %v415
    %v417 = vtanh.pop %v416
    %v418 = vmul.f32 %v413, %v417
    %v419 = vpack.c.bf16 %v418, %v418
    %v421 = vperm.slane %v84, 0
    %v439 = vunpack.c.l.b16 %v68
    %v440 = vunpack.c.l.b16 %v69
    %v441 = vunpack.c.l.b16 %v70
    %v442 = vunpack.c.l.b16 %v71
    %v443 = vunpack.c.l.b16 %v72
    %v444 = vunpack.c.l.b16 %v73
    %v445 = vunpack.c.l.b16 %v74
    %v446 = vunpack.c.l.b16 %v75
    %v447 = vunpack.c.l.b16 %v76
    %v448 = vunpack.c.l.b16 %v77
    %v449 = vunpack.c.l.b16 %v78
    %v450 = vunpack.c.l.b16 %v79
    %v451 = vunpack.c.l.b16 %v80
    %v452 = vunpack.c.l.b16 %v81
    %v453 = vunpack.c.l.b16 %v82
    %v454 = vunpack.c.l.b16 %v83
    %v455 = vpack.c.b16 %v440, %v439
    %v456 = vpack.c.b16 %v442, %v441
    %v457 = vpack.c.b16 %v444, %v443
    %v458 = vpack.c.b16 %v446, %v445
    %v459 = vpack.c.b16 %v448, %v447
    %v460 = vpack.c.b16 %v450, %v449
    %v461 = vpack.c.b16 %v452, %v451
    %v462 = vpack.c.b16 %v454, %v453
    %471 = vmatpush.bf16.msra.mxu0 %v462
    %472 = vmatpush.bf16.msra.mxu0 %v461
    %473 = vmatpush.bf16.msra.mxu0 %v460
    %474 = vmatpush.bf16.msra.mxu0 %v459
    %475 = vmatpush.bf16.msra.mxu0 %v458
    %476 = vmatpush.bf16.msra.mxu0 %v457
    %477 = vmatpush.bf16.msra.mxu0 %v456
    %478 = vmatpush.bf16.msra.mxu0 %v455
    %479 = vmatmul.bf16.gmra.mxu0 %v419
    %v480 = vpop.f32.mrf.mxu0
    %v481 = vadd.f32 %v421, %v480
    %v482 = vpop.f32.mrf.mxu0
    %483 = vdwg.mxu0
    %v485 = vrot.slane %v481, 1
    %487 = vst [vmem:[#allocation4] sm:$0x1] %v481
    %488 = vst [vmem:[#allocation4 + $0x8] sm:$0x1] %v485
    %v489 = vld [vmem:[%s0 + $0x1] sm:$0x1]
    %v490 = vld [vmem:[%s0 + $0x9] sm:$0x1]
    %v491 = vpack.c.bf16 %v489, %v489
    %v492 = vpack.c.bf16 %v490, %v490
    %493 = vmatpush.bf16.msra.mxu0 %v216
    %494 = vmatpush.bf16.msra.mxu0 %v212
    %495 = vmatpush.bf16.msra.mxu0 %v208
    %496 = vmatpush.bf16.msra.mxu0 %v204
    %497 = vmatpush.bf16.msra.mxu0 %v200
    %498 = vmatpush.bf16.msra.mxu0 %v196
    %499 = vmatpush.bf16.msra.mxu0 %v192
    %500 = vmatpush.bf16.msra.mxu0 %v188
    %501 = vmatmul.bf16.gmra.mxu0 %v419
    %v502 = vpop.f32.mrf.mxu0
    %v503 = vadd.f32 0.0, %v502
    %v504 = vpop.f32.mrf.mxu0
    %505 = vdwg.mxu0
    %506 = vmatpush.bf16.msra.mxu0 %v217
    %507 = vmatpush.bf16.msra.mxu0 %v213
    %508 = vmatpush.bf16.msra.mxu0 %v209
    %509 = vmatpush.bf16.msra.mxu0 %v205
    %510 = vmatpush.bf16.msra.mxu0 %v201
    %511 = vmatpush.bf16.msra.mxu0 %v197
    %512 = vmatpush.bf16.msra.mxu0 %v193
    %513 = vmatpush.bf16.msra.mxu0 %v189
    %514 = vmatmul.bf16.gmra.mxu0 %v419
    %v515 = vpop.f32.mrf.mxu0
    %v516 = vadd.f32 0.0, %v515
    %v517 = vpop.f32.mrf.mxu0
    %518 = vdwg.mxu0
    %519 = vmatpush.bf16.msra.mxu0 %v218
    %520 = vmatpush.bf16.msra.mxu0 %v214
    %521 = vmatpush.bf16.msra.mxu0 %v210
    %522 = vmatpush.bf16.msra.mxu0 %v206
    %523 = vmatpush.bf16.msra.mxu0 %v202
    %524 = vmatpush.bf16.msra.mxu0 %v198
    %525 = vmatpush.bf16.msra.mxu0 %v194
    %526 = vmatpush.bf16.msra.mxu0 %v190
    %527 = vmatmul.bf16.gmra.mxu0 %v419
    %v528 = vpop.f32.mrf.mxu0
    %v529 = vadd.f32 0.0, %v528
    %v530 = vpop.f32.mrf.mxu0
    %531 = vdwg.mxu0
    %532 = vmatpush.bf16.msra.mxu0 %v219
    %533 = vmatpush.bf16.msra.mxu0 %v215
    %534 = vmatpush.bf16.msra.mxu0 %v211
    %535 = vmatpush.bf16.msra.mxu0 %v207
    %536 = vmatpush.bf16.msra.mxu0 %v203
    %537 = vmatpush.bf16.msra.mxu0 %v199
    %538 = vmatpush.bf16.msra.mxu0 %v195
    %539 = vmatpush.bf16.msra.mxu0 %v191
    %540 = vmatmul.bf16.gmra.mxu0 %v419
    %v541 = vpop.f32.mrf.mxu0
    %v542 = vadd.f32 0.0, %v541
    %v543 = vpop.f32.mrf.mxu0
    %544 = vdwg.mxu0
    %v547 = vunpack.c.l.b16 %v491
    %v548 = vunpack.c.l.b16 %v492
    %v549 = vrot.slane %v548, 7
    %v550 = vsel %vm309, %v549, %v547
    %v551 = vpack.c.b16 %v550, %v550
    %v553 = vsel %vm332, %v551, 0
    %555 = vmatpush.bf16.msra.mxu0 0
    %556 = vmatpush.bf16.msra.mxu0 0
    %557 = vmatpush.bf16.msra.mxu0 0
    %558 = vmatpush.bf16.msra.mxu0 0
    %559 = vmatpush.bf16.msra.mxu0 0
    %560 = vmatpush.bf16.msra.mxu0 0
    %561 = vmatpush.bf16.msra.mxu0 0
    %562 = vmatpush.bf16.msra.mxu0 %v324
    %563 = vmatmul.bf16.gmra.mxu0 %v553
    %v564 = vpop.f32.mrf.mxu0
    %v565 = vadd.f32 %v503, %v564
    %v566 = vpop.f32.mrf.mxu0
    %567 = vdwg.mxu0
    %568 = vmatpush.bf16.msra.mxu0 0
    %569 = vmatpush.bf16.msra.mxu0 0
    %570 = vmatpush.bf16.msra.mxu0 0
    %571 = vmatpush.bf16.msra.mxu0 0
    %572 = vmatpush.bf16.msra.mxu0 0
    %573 = vmatpush.bf16.msra.mxu0 0
    %574 = vmatpush.bf16.msra.mxu0 0
    %575 = vmatpush.bf16.msra.mxu0 %v325
    %576 = vmatmul.bf16.gmra.mxu0 %v553
    %v577 = vpop.f32.mrf.mxu0
    %v578 = vadd.f32 %v516, %v577
    %v579 = vpop.f32.mrf.mxu0
    %580 = vdwg.mxu0
    %581 = vmatpush.bf16.msra.mxu0 0
    %582 = vmatpush.bf16.msra.mxu0 0
    %583 = vmatpush.bf16.msra.mxu0 0
    %584 = vmatpush.bf16.msra.mxu0 0
    %585 = vmatpush.bf16.msra.mxu0 0
    %586 = vmatpush.bf16.msra.mxu0 0
    %587 = vmatpush.bf16.msra.mxu0 0
    %588 = vmatpush.bf16.msra.mxu0 %v326
    %589 = vmatmul.bf16.gmra.mxu0 %v553
    %v590 = vpop.f32.mrf.mxu0
    %v591 = vadd.f32 %v529, %v590
    %v592 = vpop.f32.mrf.mxu0
    %593 = vdwg.mxu0
    %594 = vmatpush.bf16.msra.mxu0 0
    %595 = vmatpush.bf16.msra.mxu0 0
    %596 = vmatpush.bf16.msra.mxu0 0
    %597 = vmatpush.bf16.msra.mxu0 0
    %598 = vmatpush.bf16.msra.mxu0 0
    %599 = vmatpush.bf16.msra.mxu0 0
    %600 = vmatpush.bf16.msra.mxu0 0
    %601 = vmatpush.bf16.msra.mxu0 %v327
    %602 = vmatmul.bf16.gmra.mxu0 %v553
    %v603 = vpop.f32.mrf.mxu0
    %v604 = vadd.f32 %v542, %v603
    %v605 = vpop.f32.mrf.mxu0
    %606 = vdwg.mxu0
    %v607 = vadd.f32 %v565, %v389
    %v608 = vadd.f32 %v578, %v390
    %v609 = vadd.f32 %v591, %v391
    %v610 = vadd.f32 %v604, %v392
    %v611 = vmul.f32 %v607, 0.5
    %v612 = vtanh.pop %v611
    %v613 = vmul.f32 %v612, 0.5
    %v614 = vadd.f32 %v613, 0.5
    %v615 = vmul.f32 %v608, 0.5
    %v616 = vtanh.pop %v615
    %v617 = vmul.f32 %v616, 0.5
    %v618 = vadd.f32 %v617, 0.5
    %v619 = vtanh.pop %v609
    %v620 = vmul.f32 %v610, 0.5
    %v621 = vtanh.pop %v620
    %v622 = vmul.f32 %v621, 0.5
    %v623 = vadd.f32 %v622, 0.5
    %v624 = vmul.f32 %v618, %v416
    %v625 = vmul.f32 %v614, %v619
    %v626 = vadd.f32 %v624, %v625
    %v627 = vtanh.pop %v626
    %v628 = vmul.f32 %v623, %v627
    %v629 = vpack.c.bf16 %v628, %v628
    %630 = vmatpush.bf16.msra.mxu0 %v462
    %631 = vmatpush.bf16.msra.mxu0 %v461
    %632 = vmatpush.bf16.msra.mxu0 %v460
    %633 = vmatpush.bf16.msra.mxu0 %v459
    %634 = vmatpush.bf16.msra.mxu0 %v458
    %635 = vmatpush.bf16.msra.mxu0 %v457
    %636 = vmatpush.bf16.msra.mxu0 %v456
    %637 = vmatpush.bf16.msra.mxu0 %v455
    %638 = vmatmul.bf16.gmra.mxu0 %v629
    %v639 = vpop.f32.mrf.mxu0
    %v640 = vadd.f32 %v421, %v639
    %v641 = vpop.f32.mrf.mxu0
    %642 = vdwg.mxu0
    %v644 = vrot.slane %v640, 1
    %646 = vst [vmem:[#allocation4 + $0x1] sm:$0x1] %v640
    %647 = vst [vmem:[#allocation4 + $0x9] sm:$0x1] %v644
    %v648 = vld [vmem:[%s0 + $0x2] sm:$0x1]
    %v649 = vld [vmem:[%s0 + $0xa] sm:$0x1]
    %v650 = vpack.c.bf16 %v648, %v648
    %v651 = vpack.c.bf16 %v649, %v649
    %652 = vmatpush.bf16.msra.mxu0 %v216
    %653 = vmatpush.bf16.msra.mxu0 %v212
    %654 = vmatpush.bf16.msra.mxu0 %v208
    %655 = vmatpush.bf16.msra.mxu0 %v204
    %656 = vmatpush.bf16.msra.mxu0 %v200
    %657 = vmatpush.bf16.msra.mxu0 %v196
    %658 = vmatpush.bf16.msra.mxu0 %v192
    %659 = vmatpush.bf16.msra.mxu0 %v188
    %660 = vmatmul.bf16.gmra.mxu0 %v629
    %v661 = vpop.f32.mrf.mxu0
    %v662 = vadd.f32 0.0, %v661
    %v663 = vpop.f32.mrf.mxu0
    %664 = vdwg.mxu0
    %665 = vmatpush.bf16.msra.mxu0 %v217
    %666 = vmatpush.bf16.msra.mxu0 %v213
    %667 = vmatpush.bf16.msra.mxu0 %v209
    %668 = vmatpush.bf16.msra.mxu0 %v205
    %669 = vmatpush.bf16.msra.mxu0 %v201
    %670 = vmatpush.bf16.msra.mxu0 %v197
    %671 = vmatpush.bf16.msra.mxu0 %v193
    %672 = vmatpush.bf16.msra.mxu0 %v189
    %673 = vmatmul.bf16.gmra.mxu0 %v629
    %v674 = vpop.f32.mrf.mxu0
    %v675 = vadd.f32 0.0, %v674
    %v676 = vpop.f32.mrf.mxu0
    %677 = vdwg.mxu0
    %678 = vmatpush.bf16.msra.mxu0 %v218
    %679 = vmatpush.bf16.msra.mxu0 %v214
    %680 = vmatpush.bf16.msra.mxu0 %v210
    %681 = vmatpush.bf16.msra.mxu0 %v206
    %682 = vmatpush.bf16.msra.mxu0 %v202
    %683 = vmatpush.bf16.msra.mxu0 %v198
    %684 = vmatpush.bf16.msra.mxu0 %v194
    %685 = vmatpush.bf16.msra.mxu0 %v190
    %686 = vmatmul.bf16.gmra.mxu0 %v629
    %v687 = vpop.f32.mrf.mxu0
    %v688 = vadd.f32 0.0, %v687
    %v689 = vpop.f32.mrf.mxu0
    %690 = vdwg.mxu0
    %691 = vmatpush.bf16.msra.mxu0 %v219
    %692 = vmatpush.bf16.msra.mxu0 %v215
    %693 = vmatpush.bf16.msra.mxu0 %v211
    %694 = vmatpush.bf16.msra.mxu0 %v207
    %695 = vmatpush.bf16.msra.mxu0 %v203
    %696 = vmatpush.bf16.msra.mxu0 %v199
    %697 = vmatpush.bf16.msra.mxu0 %v195
    %698 = vmatpush.bf16.msra.mxu0 %v191
    %699 = vmatmul.bf16.gmra.mxu0 %v629
    %v700 = vpop.f32.mrf.mxu0
    %v701 = vadd.f32 0.0, %v700
    %v702 = vpop.f32.mrf.mxu0
    %703 = vdwg.mxu0
    %v706 = vunpack.c.l.b16 %v650
    %v707 = vunpack.c.l.b16 %v651
    %v708 = vrot.slane %v707, 7
    %v709 = vsel %vm309, %v708, %v706
    %v710 = vpack.c.b16 %v709, %v709
    %v712 = vsel %vm332, %v710, 0
    %714 = vmatpush.bf16.msra.mxu0 0
    %715 = vmatpush.bf16.msra.mxu0 0
    %716 = vmatpush.bf16.msra.mxu0 0
    %717 = vmatpush.bf16.msra.mxu0 0
    %718 = vmatpush.bf16.msra.mxu0 0
    %719 = vmatpush.bf16.msra.mxu0 0
    %720 = vmatpush.bf16.msra.mxu0 0
    %721 = vmatpush.bf16.msra.mxu0 %v324
    %722 = vmatmul.bf16.gmra.mxu0 %v712
    %v723 = vpop.f32.mrf.mxu0
    %v724 = vadd.f32 %v662, %v723
    %v725 = vpop.f32.mrf.mxu0
    %726 = vdwg.mxu0
    %727 = vmatpush.bf16.msra.mxu0 0
    %728 = vmatpush.bf16.msra.mxu0 0
    %729 = vmatpush.bf16.msra.mxu0 0
    %730 = vmatpush.bf16.msra.mxu0 0
    %731 = vmatpush.bf16.msra.mxu0 0
    %732 = vmatpush.bf16.msra.mxu0 0
    %733 = vmatpush.bf16.msra.mxu0 0
    %734 = vmatpush.bf16.msra.mxu0 %v325
    %735 = vmatmul.bf16.gmra.mxu0 %v712
    %v736 = vpop.f32.mrf.mxu0
    %v737 = vadd.f32 %v675, %v736
    %v738 = vpop.f32.mrf.mxu0
    %739 = vdwg.mxu0
    %740 = vmatpush.bf16.msra.mxu0 0
    %741 = vmatpush.bf16.msra.mxu0 0
    %742 = vmatpush.bf16.msra.mxu0 0
    %743 = vmatpush.bf16.msra.mxu0 0
    %744 = vmatpush.bf16.msra.mxu0 0
    %745 = vmatpush.bf16.msra.mxu0 0
    %746 = vmatpush.bf16.msra.mxu0 0
    %747 = vmatpush.bf16.msra.mxu0 %v326
    %748 = vmatmul.bf16.gmra.mxu0 %v712
    %v749 = vpop.f32.mrf.mxu0
    %v750 = vadd.f32 %v688, %v749
    %v751 = vpop.f32.mrf.mxu0
    %752 = vdwg.mxu0
    %753 = vmatpush.bf16.msra.mxu0 0
    %754 = vmatpush.bf16.msra.mxu0 0
    %755 = vmatpush.bf16.msra.mxu0 0
    %756 = vmatpush.bf16.msra.mxu0 0
    %757 = vmatpush.bf16.msra.mxu0 0
    %758 = vmatpush.bf16.msra.mxu0 0
    %759 = vmatpush.bf16.msra.mxu0 0
    %760 = vmatpush.bf16.msra.mxu0 %v327
    %761 = vmatmul.bf16.gmra.mxu0 %v712
    %v762 = vpop.f32.mrf.mxu0
    %v763 = vadd.f32 %v701, %v762
    %v764 = vpop.f32.mrf.mxu0
    %765 = vdwg.mxu0
    %v766 = vadd.f32 %v724, %v389
    %v767 = vadd.f32 %v737, %v390
    %v768 = vadd.f32 %v750, %v391
    %v769 = vadd.f32 %v763, %v392
    %v770 = vmul.f32 %v766, 0.5
    %v771 = vtanh.pop %v770
    %v772 = vmul.f32 %v771, 0.5
    %v773 = vadd.f32 %v772, 0.5
    %v774 = vmul.f32 %v767, 0.5
    %v775 = vtanh.pop %v774
    %v776 = vmul.f32 %v775, 0.5
    %v777 = vadd.f32 %v776, 0.5
    %v778 = vtanh.pop %v768
    %v779 = vmul.f32 %v769, 0.5
    %v780 = vtanh.pop %v779
    %v781 = vmul.f32 %v780, 0.5
    %v782 = vadd.f32 %v781, 0.5
    %v783 = vmul.f32 %v777, %v626
    %v784 = vmul.f32 %v773, %v778
    %v785 = vadd.f32 %v783, %v784
    %v786 = vtanh.pop %v785
    %v787 = vmul.f32 %v782, %v786
    %v788 = vpack.c.bf16 %v787, %v787
    %789 = vmatpush.bf16.msra.mxu0 %v462
    %790 = vmatpush.bf16.msra.mxu0 %v461
    %791 = vmatpush.bf16.msra.mxu0 %v460
    %792 = vmatpush.bf16.msra.mxu0 %v459
    %793 = vmatpush.bf16.msra.mxu0 %v458
    %794 = vmatpush.bf16.msra.mxu0 %v457
    %795 = vmatpush.bf16.msra.mxu0 %v456
    %796 = vmatpush.bf16.msra.mxu0 %v455
    %797 = vmatmul.bf16.gmra.mxu0 %v788
    %v798 = vpop.f32.mrf.mxu0
    %v799 = vadd.f32 %v421, %v798
    %v800 = vpop.f32.mrf.mxu0
    %801 = vdwg.mxu0
    %v803 = vrot.slane %v799, 1
    %805 = vst [vmem:[#allocation4 + $0x2] sm:$0x1] %v799
    %806 = vst [vmem:[#allocation4 + $0xa] sm:$0x1] %v803
    %v807 = vld [vmem:[%s0 + $0x3] sm:$0x1]
    %v808 = vld [vmem:[%s0 + $0xb] sm:$0x1]
    %v809 = vpack.c.bf16 %v807, %v807
    %v810 = vpack.c.bf16 %v808, %v808
    %811 = vmatpush.bf16.msra.mxu0 %v216
    %812 = vmatpush.bf16.msra.mxu0 %v212
    %813 = vmatpush.bf16.msra.mxu0 %v208
    %814 = vmatpush.bf16.msra.mxu0 %v204
    %815 = vmatpush.bf16.msra.mxu0 %v200
    %816 = vmatpush.bf16.msra.mxu0 %v196
    %817 = vmatpush.bf16.msra.mxu0 %v192
    %818 = vmatpush.bf16.msra.mxu0 %v188
    %819 = vmatmul.bf16.gmra.mxu0 %v788
    %v820 = vpop.f32.mrf.mxu0
    %v821 = vadd.f32 0.0, %v820
    %v822 = vpop.f32.mrf.mxu0
    %823 = vdwg.mxu0
    %824 = vmatpush.bf16.msra.mxu0 %v217
    %825 = vmatpush.bf16.msra.mxu0 %v213
    %826 = vmatpush.bf16.msra.mxu0 %v209
    %827 = vmatpush.bf16.msra.mxu0 %v205
    %828 = vmatpush.bf16.msra.mxu0 %v201
    %829 = vmatpush.bf16.msra.mxu0 %v197
    %830 = vmatpush.bf16.msra.mxu0 %v193
    %831 = vmatpush.bf16.msra.mxu0 %v189
    %832 = vmatmul.bf16.gmra.mxu0 %v788
    %v833 = vpop.f32.mrf.mxu0
    %v834 = vadd.f32 0.0, %v833
    %v835 = vpop.f32.mrf.mxu0
    %836 = vdwg.mxu0
    %837 = vmatpush.bf16.msra.mxu0 %v218
    %838 = vmatpush.bf16.msra.mxu0 %v214
    %839 = vmatpush.bf16.msra.mxu0 %v210
    %840 = vmatpush.bf16.msra.mxu0 %v206
    %841 = vmatpush.bf16.msra.mxu0 %v202
    %842 = vmatpush.bf16.msra.mxu0 %v198
    %843 = vmatpush.bf16.msra.mxu0 %v194
    %844 = vmatpush.bf16.msra.mxu0 %v190
    %845 = vmatmul.bf16.gmra.mxu0 %v788
    %v846 = vpop.f32.mrf.mxu0
    %v847 = vadd.f32 0.0, %v846
    %v848 = vpop.f32.mrf.mxu0
    %849 = vdwg.mxu0
    %850 = vmatpush.bf16.msra.mxu0 %v219
    %851 = vmatpush.bf16.msra.mxu0 %v215
    %852 = vmatpush.bf16.msra.mxu0 %v211
    %853 = vmatpush.bf16.msra.mxu0 %v207
    %854 = vmatpush.bf16.msra.mxu0 %v203
    %855 = vmatpush.bf16.msra.mxu0 %v199
    %856 = vmatpush.bf16.msra.mxu0 %v195
    %857 = vmatpush.bf16.msra.mxu0 %v191
    %858 = vmatmul.bf16.gmra.mxu0 %v788
    %v859 = vpop.f32.mrf.mxu0
    %v860 = vadd.f32 0.0, %v859
    %v861 = vpop.f32.mrf.mxu0
    %862 = vdwg.mxu0
    %v865 = vunpack.c.l.b16 %v809
    %v866 = vunpack.c.l.b16 %v810
    %v867 = vrot.slane %v866, 7
    %v868 = vsel %vm309, %v867, %v865
    %v869 = vpack.c.b16 %v868, %v868
    %v871 = vsel %vm332, %v869, 0
    %873 = vmatpush.bf16.msra.mxu0 0
    %874 = vmatpush.bf16.msra.mxu0 0
    %875 = vmatpush.bf16.msra.mxu0 0
    %876 = vmatpush.bf16.msra.mxu0 0
    %877 = vmatpush.bf16.msra.mxu0 0
    %878 = vmatpush.bf16.msra.mxu0 0
    %879 = vmatpush.bf16.msra.mxu0 0
    %880 = vmatpush.bf16.msra.mxu0 %v324
    %881 = vmatmul.bf16.gmra.mxu0 %v871
    %v882 = vpop.f32.mrf.mxu0
    %v883 = vadd.f32 %v821, %v882
    %v884 = vpop.f32.mrf.mxu0
    %885 = vdwg.mxu0
    %886 = vmatpush.bf16.msra.mxu0 0
    %887 = vmatpush.bf16.msra.mxu0 0
    %888 = vmatpush.bf16.msra.mxu0 0
    %889 = vmatpush.bf16.msra.mxu0 0
    %890 = vmatpush.bf16.msra.mxu0 0
    %891 = vmatpush.bf16.msra.mxu0 0
    %892 = vmatpush.bf16.msra.mxu0 0
    %893 = vmatpush.bf16.msra.mxu0 %v325
    %894 = vmatmul.bf16.gmra.mxu0 %v871
    %v895 = vpop.f32.mrf.mxu0
    %v896 = vadd.f32 %v834, %v895
    %v897 = vpop.f32.mrf.mxu0
    %898 = vdwg.mxu0
    %899 = vmatpush.bf16.msra.mxu0 0
    %900 = vmatpush.bf16.msra.mxu0 0
    %901 = vmatpush.bf16.msra.mxu0 0
    %902 = vmatpush.bf16.msra.mxu0 0
    %903 = vmatpush.bf16.msra.mxu0 0
    %904 = vmatpush.bf16.msra.mxu0 0
    %905 = vmatpush.bf16.msra.mxu0 0
    %906 = vmatpush.bf16.msra.mxu0 %v326
    %907 = vmatmul.bf16.gmra.mxu0 %v871
    %v908 = vpop.f32.mrf.mxu0
    %v909 = vadd.f32 %v847, %v908
    %v910 = vpop.f32.mrf.mxu0
    %911 = vdwg.mxu0
    %912 = vmatpush.bf16.msra.mxu0 0
    %913 = vmatpush.bf16.msra.mxu0 0
    %914 = vmatpush.bf16.msra.mxu0 0
    %915 = vmatpush.bf16.msra.mxu0 0
    %916 = vmatpush.bf16.msra.mxu0 0
    %917 = vmatpush.bf16.msra.mxu0 0
    %918 = vmatpush.bf16.msra.mxu0 0
    %919 = vmatpush.bf16.msra.mxu0 %v327
    %920 = vmatmul.bf16.gmra.mxu0 %v871
    %v921 = vpop.f32.mrf.mxu0
    %v922 = vadd.f32 %v860, %v921
    %v923 = vpop.f32.mrf.mxu0
    %924 = vdwg.mxu0
    %v925 = vadd.f32 %v883, %v389
    %v926 = vadd.f32 %v896, %v390
    %v927 = vadd.f32 %v909, %v391
    %v928 = vadd.f32 %v922, %v392
    %v929 = vmul.f32 %v925, 0.5
    %v930 = vtanh.pop %v929
    %v931 = vmul.f32 %v930, 0.5
    %v932 = vadd.f32 %v931, 0.5
    %v933 = vmul.f32 %v926, 0.5
    %v934 = vtanh.pop %v933
    %v935 = vmul.f32 %v934, 0.5
    %v936 = vadd.f32 %v935, 0.5
    %v937 = vtanh.pop %v927
    %v938 = vmul.f32 %v928, 0.5
    %v939 = vtanh.pop %v938
    %v940 = vmul.f32 %v939, 0.5
    %v941 = vadd.f32 %v940, 0.5
    %v942 = vmul.f32 %v936, %v785
    %v943 = vmul.f32 %v932, %v937
    %v944 = vadd.f32 %v942, %v943
    %v945 = vtanh.pop %v944
    %v946 = vmul.f32 %v941, %v945
    %v947 = vpack.c.bf16 %v946, %v946
    %948 = vmatpush.bf16.msra.mxu0 %v462
    %949 = vmatpush.bf16.msra.mxu0 %v461
    %950 = vmatpush.bf16.msra.mxu0 %v460
    %951 = vmatpush.bf16.msra.mxu0 %v459
    %952 = vmatpush.bf16.msra.mxu0 %v458
    %953 = vmatpush.bf16.msra.mxu0 %v457
    %954 = vmatpush.bf16.msra.mxu0 %v456
    %955 = vmatpush.bf16.msra.mxu0 %v455
    %956 = vmatmul.bf16.gmra.mxu0 %v947
    %v957 = vpop.f32.mrf.mxu0
    %v958 = vadd.f32 %v421, %v957
    %v959 = vpop.f32.mrf.mxu0
    %960 = vdwg.mxu0
    %v962 = vrot.slane %v958, 1
    %964 = vst [vmem:[#allocation4 + $0x3] sm:$0x1] %v958
    %965 = vst [vmem:[#allocation4 + $0xb] sm:$0x1] %v962
    %v966 = vld [vmem:[%s0 + $0x4] sm:$0x1]
    %v967 = vld [vmem:[%s0 + $0xc] sm:$0x1]
    %v968 = vpack.c.bf16 %v966, %v966
    %v969 = vpack.c.bf16 %v967, %v967
    %970 = vmatpush.bf16.msra.mxu0 %v216
    %971 = vmatpush.bf16.msra.mxu0 %v212
    %972 = vmatpush.bf16.msra.mxu0 %v208
    %973 = vmatpush.bf16.msra.mxu0 %v204
    %974 = vmatpush.bf16.msra.mxu0 %v200
    %975 = vmatpush.bf16.msra.mxu0 %v196
    %976 = vmatpush.bf16.msra.mxu0 %v192
    %977 = vmatpush.bf16.msra.mxu0 %v188
    %978 = vmatmul.bf16.gmra.mxu0 %v947
    %v979 = vpop.f32.mrf.mxu0
    %v980 = vadd.f32 0.0, %v979
    %v981 = vpop.f32.mrf.mxu0
    %982 = vdwg.mxu0
    %983 = vmatpush.bf16.msra.mxu0 %v217
    %984 = vmatpush.bf16.msra.mxu0 %v213
    %985 = vmatpush.bf16.msra.mxu0 %v209
    %986 = vmatpush.bf16.msra.mxu0 %v205
    %987 = vmatpush.bf16.msra.mxu0 %v201
    %988 = vmatpush.bf16.msra.mxu0 %v197
    %989 = vmatpush.bf16.msra.mxu0 %v193
    %990 = vmatpush.bf16.msra.mxu0 %v189
    %991 = vmatmul.bf16.gmra.mxu0 %v947
    %v992 = vpop.f32.mrf.mxu0
    %v993 = vadd.f32 0.0, %v992
    %v994 = vpop.f32.mrf.mxu0
    %995 = vdwg.mxu0
    %996 = vmatpush.bf16.msra.mxu0 %v218
    %997 = vmatpush.bf16.msra.mxu0 %v214
    %998 = vmatpush.bf16.msra.mxu0 %v210
    %999 = vmatpush.bf16.msra.mxu0 %v206
    %1000 = vmatpush.bf16.msra.mxu0 %v202
    %1001 = vmatpush.bf16.msra.mxu0 %v198
    %1002 = vmatpush.bf16.msra.mxu0 %v194
    %1003 = vmatpush.bf16.msra.mxu0 %v190
    %1004 = vmatmul.bf16.gmra.mxu0 %v947
    %v1005 = vpop.f32.mrf.mxu0
    %v1006 = vadd.f32 0.0, %v1005
    %v1007 = vpop.f32.mrf.mxu0
    %1008 = vdwg.mxu0
    %1009 = vmatpush.bf16.msra.mxu0 %v219
    %1010 = vmatpush.bf16.msra.mxu0 %v215
    %1011 = vmatpush.bf16.msra.mxu0 %v211
    %1012 = vmatpush.bf16.msra.mxu0 %v207
    %1013 = vmatpush.bf16.msra.mxu0 %v203
    %1014 = vmatpush.bf16.msra.mxu0 %v199
    %1015 = vmatpush.bf16.msra.mxu0 %v195
    %1016 = vmatpush.bf16.msra.mxu0 %v191
    %1017 = vmatmul.bf16.gmra.mxu0 %v947
    %v1018 = vpop.f32.mrf.mxu0
    %v1019 = vadd.f32 0.0, %v1018
    %v1020 = vpop.f32.mrf.mxu0
    %1021 = vdwg.mxu0
    %v1024 = vunpack.c.l.b16 %v968
    %v1025 = vunpack.c.l.b16 %v969
    %v1026 = vrot.slane %v1025, 7
    %v1027 = vsel %vm309, %v1026, %v1024
    %v1028 = vpack.c.b16 %v1027, %v1027
    %v1030 = vsel %vm332, %v1028, 0
    %1032 = vmatpush.bf16.msra.mxu0 0
    %1033 = vmatpush.bf16.msra.mxu0 0
    %1034 = vmatpush.bf16.msra.mxu0 0
    %1035 = vmatpush.bf16.msra.mxu0 0
    %1036 = vmatpush.bf16.msra.mxu0 0
    %1037 = vmatpush.bf16.msra.mxu0 0
    %1038 = vmatpush.bf16.msra.mxu0 0
    %1039 = vmatpush.bf16.msra.mxu0 %v324
    %1040 = vmatmul.bf16.gmra.mxu0 %v1030
    %v1041 = vpop.f32.mrf.mxu0
    %v1042 = vadd.f32 %v980, %v1041
    %v1043 = vpop.f32.mrf.mxu0
    %1044 = vdwg.mxu0
    %1045 = vmatpush.bf16.msra.mxu0 0
    %1046 = vmatpush.bf16.msra.mxu0 0
    %1047 = vmatpush.bf16.msra.mxu0 0
    %1048 = vmatpush.bf16.msra.mxu0 0
    %1049 = vmatpush.bf16.msra.mxu0 0
    %1050 = vmatpush.bf16.msra.mxu0 0
    %1051 = vmatpush.bf16.msra.mxu0 0
    %1052 = vmatpush.bf16.msra.mxu0 %v325
    %1053 = vmatmul.bf16.gmra.mxu0 %v1030
    %v1054 = vpop.f32.mrf.mxu0
    %v1055 = vadd.f32 %v993, %v1054
    %v1056 = vpop.f32.mrf.mxu0
    %1057 = vdwg.mxu0
    %1058 = vmatpush.bf16.msra.mxu0 0
    %1059 = vmatpush.bf16.msra.mxu0 0
    %1060 = vmatpush.bf16.msra.mxu0 0
    %1061 = vmatpush.bf16.msra.mxu0 0
    %1062 = vmatpush.bf16.msra.mxu0 0
    %1063 = vmatpush.bf16.msra.mxu0 0
    %1064 = vmatpush.bf16.msra.mxu0 0
    %1065 = vmatpush.bf16.msra.mxu0 %v326
    %1066 = vmatmul.bf16.gmra.mxu0 %v1030
    %v1067 = vpop.f32.mrf.mxu0
    %v1068 = vadd.f32 %v1006, %v1067
    %v1069 = vpop.f32.mrf.mxu0
    %1070 = vdwg.mxu0
    %1071 = vmatpush.bf16.msra.mxu0 0
    %1072 = vmatpush.bf16.msra.mxu0 0
    %1073 = vmatpush.bf16.msra.mxu0 0
    %1074 = vmatpush.bf16.msra.mxu0 0
    %1075 = vmatpush.bf16.msra.mxu0 0
    %1076 = vmatpush.bf16.msra.mxu0 0
    %1077 = vmatpush.bf16.msra.mxu0 0
    %1078 = vmatpush.bf16.msra.mxu0 %v327
    %1079 = vmatmul.bf16.gmra.mxu0 %v1030
    %v1080 = vpop.f32.mrf.mxu0
    %v1081 = vadd.f32 %v1019, %v1080
    %v1082 = vpop.f32.mrf.mxu0
    %1083 = vdwg.mxu0
    %v1084 = vadd.f32 %v1042, %v389
    %v1085 = vadd.f32 %v1055, %v390
    %v1086 = vadd.f32 %v1068, %v391
    %v1087 = vadd.f32 %v1081, %v392
    %v1088 = vmul.f32 %v1084, 0.5
    %v1089 = vtanh.pop %v1088
    %v1090 = vmul.f32 %v1089, 0.5
    %v1091 = vadd.f32 %v1090, 0.5
    %v1092 = vmul.f32 %v1085, 0.5
    %v1093 = vtanh.pop %v1092
    %v1094 = vmul.f32 %v1093, 0.5
    %v1095 = vadd.f32 %v1094, 0.5
    %v1096 = vtanh.pop %v1086
    %v1097 = vmul.f32 %v1087, 0.5
    %v1098 = vtanh.pop %v1097
    %v1099 = vmul.f32 %v1098, 0.5
    %v1100 = vadd.f32 %v1099, 0.5
    %v1101 = vmul.f32 %v1095, %v944
    %v1102 = vmul.f32 %v1091, %v1096
    %v1103 = vadd.f32 %v1101, %v1102
    %v1104 = vtanh.pop %v1103
    %v1105 = vmul.f32 %v1100, %v1104
    %v1106 = vpack.c.bf16 %v1105, %v1105
    %1107 = vmatpush.bf16.msra.mxu0 %v462
    %1108 = vmatpush.bf16.msra.mxu0 %v461
    %1109 = vmatpush.bf16.msra.mxu0 %v460
    %1110 = vmatpush.bf16.msra.mxu0 %v459
    %1111 = vmatpush.bf16.msra.mxu0 %v458
    %1112 = vmatpush.bf16.msra.mxu0 %v457
    %1113 = vmatpush.bf16.msra.mxu0 %v456
    %1114 = vmatpush.bf16.msra.mxu0 %v455
    %1115 = vmatmul.bf16.gmra.mxu0 %v1106
    %v1116 = vpop.f32.mrf.mxu0
    %v1117 = vadd.f32 %v421, %v1116
    %v1118 = vpop.f32.mrf.mxu0
    %1119 = vdwg.mxu0
    %v1121 = vrot.slane %v1117, 1
    %1123 = vst [vmem:[#allocation4 + $0x4] sm:$0x1] %v1117
    %1124 = vst [vmem:[#allocation4 + $0xc] sm:$0x1] %v1121
    %v1125 = vld [vmem:[%s0 + $0x5] sm:$0x1]
    %v1126 = vld [vmem:[%s0 + $0xd] sm:$0x1]
    %v1127 = vpack.c.bf16 %v1125, %v1125
    %v1128 = vpack.c.bf16 %v1126, %v1126
    %1129 = vmatpush.bf16.msra.mxu0 %v216
    %1130 = vmatpush.bf16.msra.mxu0 %v212
    %1131 = vmatpush.bf16.msra.mxu0 %v208
    %1132 = vmatpush.bf16.msra.mxu0 %v204
    %1133 = vmatpush.bf16.msra.mxu0 %v200
    %1134 = vmatpush.bf16.msra.mxu0 %v196
    %1135 = vmatpush.bf16.msra.mxu0 %v192
    %1136 = vmatpush.bf16.msra.mxu0 %v188
    %1137 = vmatmul.bf16.gmra.mxu0 %v1106
    %v1138 = vpop.f32.mrf.mxu0
    %v1139 = vadd.f32 0.0, %v1138
    %v1140 = vpop.f32.mrf.mxu0
    %1141 = vdwg.mxu0
    %1142 = vmatpush.bf16.msra.mxu0 %v217
    %1143 = vmatpush.bf16.msra.mxu0 %v213
    %1144 = vmatpush.bf16.msra.mxu0 %v209
    %1145 = vmatpush.bf16.msra.mxu0 %v205
    %1146 = vmatpush.bf16.msra.mxu0 %v201
    %1147 = vmatpush.bf16.msra.mxu0 %v197
    %1148 = vmatpush.bf16.msra.mxu0 %v193
    %1149 = vmatpush.bf16.msra.mxu0 %v189
    %1150 = vmatmul.bf16.gmra.mxu0 %v1106
    %v1151 = vpop.f32.mrf.mxu0
    %v1152 = vadd.f32 0.0, %v1151
    %v1153 = vpop.f32.mrf.mxu0
    %1154 = vdwg.mxu0
    %1155 = vmatpush.bf16.msra.mxu0 %v218
    %1156 = vmatpush.bf16.msra.mxu0 %v214
    %1157 = vmatpush.bf16.msra.mxu0 %v210
    %1158 = vmatpush.bf16.msra.mxu0 %v206
    %1159 = vmatpush.bf16.msra.mxu0 %v202
    %1160 = vmatpush.bf16.msra.mxu0 %v198
    %1161 = vmatpush.bf16.msra.mxu0 %v194
    %1162 = vmatpush.bf16.msra.mxu0 %v190
    %1163 = vmatmul.bf16.gmra.mxu0 %v1106
    %v1164 = vpop.f32.mrf.mxu0
    %v1165 = vadd.f32 0.0, %v1164
    %v1166 = vpop.f32.mrf.mxu0
    %1167 = vdwg.mxu0
    %1168 = vmatpush.bf16.msra.mxu0 %v219
    %1169 = vmatpush.bf16.msra.mxu0 %v215
    %1170 = vmatpush.bf16.msra.mxu0 %v211
    %1171 = vmatpush.bf16.msra.mxu0 %v207
    %1172 = vmatpush.bf16.msra.mxu0 %v203
    %1173 = vmatpush.bf16.msra.mxu0 %v199
    %1174 = vmatpush.bf16.msra.mxu0 %v195
    %1175 = vmatpush.bf16.msra.mxu0 %v191
    %1176 = vmatmul.bf16.gmra.mxu0 %v1106
    %v1177 = vpop.f32.mrf.mxu0
    %v1178 = vadd.f32 0.0, %v1177
    %v1179 = vpop.f32.mrf.mxu0
    %1180 = vdwg.mxu0
    %v1183 = vunpack.c.l.b16 %v1127
    %v1184 = vunpack.c.l.b16 %v1128
    %v1185 = vrot.slane %v1184, 7
    %v1186 = vsel %vm309, %v1185, %v1183
    %v1187 = vpack.c.b16 %v1186, %v1186
    %v1189 = vsel %vm332, %v1187, 0
    %1191 = vmatpush.bf16.msra.mxu0 0
    %1192 = vmatpush.bf16.msra.mxu0 0
    %1193 = vmatpush.bf16.msra.mxu0 0
    %1194 = vmatpush.bf16.msra.mxu0 0
    %1195 = vmatpush.bf16.msra.mxu0 0
    %1196 = vmatpush.bf16.msra.mxu0 0
    %1197 = vmatpush.bf16.msra.mxu0 0
    %1198 = vmatpush.bf16.msra.mxu0 %v324
    %1199 = vmatmul.bf16.gmra.mxu0 %v1189
    %v1200 = vpop.f32.mrf.mxu0
    %v1201 = vadd.f32 %v1139, %v1200
    %v1202 = vpop.f32.mrf.mxu0
    %1203 = vdwg.mxu0
    %1204 = vmatpush.bf16.msra.mxu0 0
    %1205 = vmatpush.bf16.msra.mxu0 0
    %1206 = vmatpush.bf16.msra.mxu0 0
    %1207 = vmatpush.bf16.msra.mxu0 0
    %1208 = vmatpush.bf16.msra.mxu0 0
    %1209 = vmatpush.bf16.msra.mxu0 0
    %1210 = vmatpush.bf16.msra.mxu0 0
    %1211 = vmatpush.bf16.msra.mxu0 %v325
    %1212 = vmatmul.bf16.gmra.mxu0 %v1189
    %v1213 = vpop.f32.mrf.mxu0
    %v1214 = vadd.f32 %v1152, %v1213
    %v1215 = vpop.f32.mrf.mxu0
    %1216 = vdwg.mxu0
    %1217 = vmatpush.bf16.msra.mxu0 0
    %1218 = vmatpush.bf16.msra.mxu0 0
    %1219 = vmatpush.bf16.msra.mxu0 0
    %1220 = vmatpush.bf16.msra.mxu0 0
    %1221 = vmatpush.bf16.msra.mxu0 0
    %1222 = vmatpush.bf16.msra.mxu0 0
    %1223 = vmatpush.bf16.msra.mxu0 0
    %1224 = vmatpush.bf16.msra.mxu0 %v326
    %1225 = vmatmul.bf16.gmra.mxu0 %v1189
    %v1226 = vpop.f32.mrf.mxu0
    %v1227 = vadd.f32 %v1165, %v1226
    %v1228 = vpop.f32.mrf.mxu0
    %1229 = vdwg.mxu0
    %1230 = vmatpush.bf16.msra.mxu0 0
    %1231 = vmatpush.bf16.msra.mxu0 0
    %1232 = vmatpush.bf16.msra.mxu0 0
    %1233 = vmatpush.bf16.msra.mxu0 0
    %1234 = vmatpush.bf16.msra.mxu0 0
    %1235 = vmatpush.bf16.msra.mxu0 0
    %1236 = vmatpush.bf16.msra.mxu0 0
    %1237 = vmatpush.bf16.msra.mxu0 %v327
    %1238 = vmatmul.bf16.gmra.mxu0 %v1189
    %v1239 = vpop.f32.mrf.mxu0
    %v1240 = vadd.f32 %v1178, %v1239
    %v1241 = vpop.f32.mrf.mxu0
    %1242 = vdwg.mxu0
    %v1243 = vadd.f32 %v1201, %v389
    %v1244 = vadd.f32 %v1214, %v390
    %v1245 = vadd.f32 %v1227, %v391
    %v1246 = vadd.f32 %v1240, %v392
    %v1247 = vmul.f32 %v1243, 0.5
    %v1248 = vtanh.pop %v1247
    %v1249 = vmul.f32 %v1248, 0.5
    %v1250 = vadd.f32 %v1249, 0.5
    %v1251 = vmul.f32 %v1244, 0.5
    %v1252 = vtanh.pop %v1251
    %v1253 = vmul.f32 %v1252, 0.5
    %v1254 = vadd.f32 %v1253, 0.5
    %v1255 = vtanh.pop %v1245
    %v1256 = vmul.f32 %v1246, 0.5
    %v1257 = vtanh.pop %v1256
    %v1258 = vmul.f32 %v1257, 0.5
    %v1259 = vadd.f32 %v1258, 0.5
    %v1260 = vmul.f32 %v1254, %v1103
    %v1261 = vmul.f32 %v1250, %v1255
    %v1262 = vadd.f32 %v1260, %v1261
    %v1263 = vtanh.pop %v1262
    %v1264 = vmul.f32 %v1259, %v1263
    %v1265 = vpack.c.bf16 %v1264, %v1264
    %1266 = vmatpush.bf16.msra.mxu0 %v462
    %1267 = vmatpush.bf16.msra.mxu0 %v461
    %1268 = vmatpush.bf16.msra.mxu0 %v460
    %1269 = vmatpush.bf16.msra.mxu0 %v459
    %1270 = vmatpush.bf16.msra.mxu0 %v458
    %1271 = vmatpush.bf16.msra.mxu0 %v457
    %1272 = vmatpush.bf16.msra.mxu0 %v456
    %1273 = vmatpush.bf16.msra.mxu0 %v455
    %1274 = vmatmul.bf16.gmra.mxu0 %v1265
    %v1275 = vpop.f32.mrf.mxu0
    %v1276 = vadd.f32 %v421, %v1275
    %v1277 = vpop.f32.mrf.mxu0
    %1278 = vdwg.mxu0
    %v1280 = vrot.slane %v1276, 1
    %1282 = vst [vmem:[#allocation4 + $0x5] sm:$0x1] %v1276
    %1283 = vst [vmem:[#allocation4 + $0xd] sm:$0x1] %v1280
    %v1284 = vld [vmem:[%s0 + $0x6] sm:$0x1]
    %v1285 = vld [vmem:[%s0 + $0xe] sm:$0x1]
    %v1286 = vpack.c.bf16 %v1284, %v1284
    %v1287 = vpack.c.bf16 %v1285, %v1285
    %1288 = vmatpush.bf16.msra.mxu0 %v216
    %1289 = vmatpush.bf16.msra.mxu0 %v212
    %1290 = vmatpush.bf16.msra.mxu0 %v208
    %1291 = vmatpush.bf16.msra.mxu0 %v204
    %1292 = vmatpush.bf16.msra.mxu0 %v200
    %1293 = vmatpush.bf16.msra.mxu0 %v196
    %1294 = vmatpush.bf16.msra.mxu0 %v192
    %1295 = vmatpush.bf16.msra.mxu0 %v188
    %1296 = vmatmul.bf16.gmra.mxu0 %v1265
    %v1297 = vpop.f32.mrf.mxu0
    %v1298 = vadd.f32 0.0, %v1297
    %v1299 = vpop.f32.mrf.mxu0
    %1300 = vdwg.mxu0
    %1301 = vmatpush.bf16.msra.mxu0 %v217
    %1302 = vmatpush.bf16.msra.mxu0 %v213
    %1303 = vmatpush.bf16.msra.mxu0 %v209
    %1304 = vmatpush.bf16.msra.mxu0 %v205
    %1305 = vmatpush.bf16.msra.mxu0 %v201
    %1306 = vmatpush.bf16.msra.mxu0 %v197
    %1307 = vmatpush.bf16.msra.mxu0 %v193
    %1308 = vmatpush.bf16.msra.mxu0 %v189
    %1309 = vmatmul.bf16.gmra.mxu0 %v1265
    %v1310 = vpop.f32.mrf.mxu0
    %v1311 = vadd.f32 0.0, %v1310
    %v1312 = vpop.f32.mrf.mxu0
    %1313 = vdwg.mxu0
    %1314 = vmatpush.bf16.msra.mxu0 %v218
    %1315 = vmatpush.bf16.msra.mxu0 %v214
    %1316 = vmatpush.bf16.msra.mxu0 %v210
    %1317 = vmatpush.bf16.msra.mxu0 %v206
    %1318 = vmatpush.bf16.msra.mxu0 %v202
    %1319 = vmatpush.bf16.msra.mxu0 %v198
    %1320 = vmatpush.bf16.msra.mxu0 %v194
    %1321 = vmatpush.bf16.msra.mxu0 %v190
    %1322 = vmatmul.bf16.gmra.mxu0 %v1265
    %v1323 = vpop.f32.mrf.mxu0
    %v1324 = vadd.f32 0.0, %v1323
    %v1325 = vpop.f32.mrf.mxu0
    %1326 = vdwg.mxu0
    %1327 = vmatpush.bf16.msra.mxu0 %v219
    %1328 = vmatpush.bf16.msra.mxu0 %v215
    %1329 = vmatpush.bf16.msra.mxu0 %v211
    %1330 = vmatpush.bf16.msra.mxu0 %v207
    %1331 = vmatpush.bf16.msra.mxu0 %v203
    %1332 = vmatpush.bf16.msra.mxu0 %v199
    %1333 = vmatpush.bf16.msra.mxu0 %v195
    %1334 = vmatpush.bf16.msra.mxu0 %v191
    %1335 = vmatmul.bf16.gmra.mxu0 %v1265
    %v1336 = vpop.f32.mrf.mxu0
    %v1337 = vadd.f32 0.0, %v1336
    %v1338 = vpop.f32.mrf.mxu0
    %1339 = vdwg.mxu0
    %v1342 = vunpack.c.l.b16 %v1286
    %v1343 = vunpack.c.l.b16 %v1287
    %v1344 = vrot.slane %v1343, 7
    %v1345 = vsel %vm309, %v1344, %v1342
    %v1346 = vpack.c.b16 %v1345, %v1345
    %v1348 = vsel %vm332, %v1346, 0
    %1350 = vmatpush.bf16.msra.mxu0 0
    %1351 = vmatpush.bf16.msra.mxu0 0
    %1352 = vmatpush.bf16.msra.mxu0 0
    %1353 = vmatpush.bf16.msra.mxu0 0
    %1354 = vmatpush.bf16.msra.mxu0 0
    %1355 = vmatpush.bf16.msra.mxu0 0
    %1356 = vmatpush.bf16.msra.mxu0 0
    %1357 = vmatpush.bf16.msra.mxu0 %v324
    %1358 = vmatmul.bf16.gmra.mxu0 %v1348
    %v1359 = vpop.f32.mrf.mxu0
    %v1360 = vadd.f32 %v1298, %v1359
    %v1361 = vpop.f32.mrf.mxu0
    %1362 = vdwg.mxu0
    %1363 = vmatpush.bf16.msra.mxu0 0
    %1364 = vmatpush.bf16.msra.mxu0 0
    %1365 = vmatpush.bf16.msra.mxu0 0
    %1366 = vmatpush.bf16.msra.mxu0 0
    %1367 = vmatpush.bf16.msra.mxu0 0
    %1368 = vmatpush.bf16.msra.mxu0 0
    %1369 = vmatpush.bf16.msra.mxu0 0
    %1370 = vmatpush.bf16.msra.mxu0 %v325
    %1371 = vmatmul.bf16.gmra.mxu0 %v1348
    %v1372 = vpop.f32.mrf.mxu0
    %v1373 = vadd.f32 %v1311, %v1372
    %v1374 = vpop.f32.mrf.mxu0
    %1375 = vdwg.mxu0
    %1376 = vmatpush.bf16.msra.mxu0 0
    %1377 = vmatpush.bf16.msra.mxu0 0
    %1378 = vmatpush.bf16.msra.mxu0 0
    %1379 = vmatpush.bf16.msra.mxu0 0
    %1380 = vmatpush.bf16.msra.mxu0 0
    %1381 = vmatpush.bf16.msra.mxu0 0
    %1382 = vmatpush.bf16.msra.mxu0 0
    %1383 = vmatpush.bf16.msra.mxu0 %v326
    %1384 = vmatmul.bf16.gmra.mxu0 %v1348
    %v1385 = vpop.f32.mrf.mxu0
    %v1386 = vadd.f32 %v1324, %v1385
    %v1387 = vpop.f32.mrf.mxu0
    %1388 = vdwg.mxu0
    %1389 = vmatpush.bf16.msra.mxu0 0
    %1390 = vmatpush.bf16.msra.mxu0 0
    %1391 = vmatpush.bf16.msra.mxu0 0
    %1392 = vmatpush.bf16.msra.mxu0 0
    %1393 = vmatpush.bf16.msra.mxu0 0
    %1394 = vmatpush.bf16.msra.mxu0 0
    %1395 = vmatpush.bf16.msra.mxu0 0
    %1396 = vmatpush.bf16.msra.mxu0 %v327
    %1397 = vmatmul.bf16.gmra.mxu0 %v1348
    %v1398 = vpop.f32.mrf.mxu0
    %v1399 = vadd.f32 %v1337, %v1398
    %v1400 = vpop.f32.mrf.mxu0
    %1401 = vdwg.mxu0
    %v1402 = vadd.f32 %v1360, %v389
    %v1403 = vadd.f32 %v1373, %v390
    %v1404 = vadd.f32 %v1386, %v391
    %v1405 = vadd.f32 %v1399, %v392
    %v1406 = vmul.f32 %v1402, 0.5
    %v1407 = vtanh.pop %v1406
    %v1408 = vmul.f32 %v1407, 0.5
    %v1409 = vadd.f32 %v1408, 0.5
    %v1410 = vmul.f32 %v1403, 0.5
    %v1411 = vtanh.pop %v1410
    %v1412 = vmul.f32 %v1411, 0.5
    %v1413 = vadd.f32 %v1412, 0.5
    %v1414 = vtanh.pop %v1404
    %v1415 = vmul.f32 %v1405, 0.5
    %v1416 = vtanh.pop %v1415
    %v1417 = vmul.f32 %v1416, 0.5
    %v1418 = vadd.f32 %v1417, 0.5
    %v1419 = vmul.f32 %v1413, %v1262
    %v1420 = vmul.f32 %v1409, %v1414
    %v1421 = vadd.f32 %v1419, %v1420
    %v1422 = vtanh.pop %v1421
    %v1423 = vmul.f32 %v1418, %v1422
    %v1424 = vpack.c.bf16 %v1423, %v1423
    %1425 = vmatpush.bf16.msra.mxu0 %v462
    %1426 = vmatpush.bf16.msra.mxu0 %v461
    %1427 = vmatpush.bf16.msra.mxu0 %v460
    %1428 = vmatpush.bf16.msra.mxu0 %v459
    %1429 = vmatpush.bf16.msra.mxu0 %v458
    %1430 = vmatpush.bf16.msra.mxu0 %v457
    %1431 = vmatpush.bf16.msra.mxu0 %v456
    %1432 = vmatpush.bf16.msra.mxu0 %v455
    %1433 = vmatmul.bf16.gmra.mxu0 %v1424
    %v1434 = vpop.f32.mrf.mxu0
    %v1435 = vadd.f32 %v421, %v1434
    %v1436 = vpop.f32.mrf.mxu0
    %1437 = vdwg.mxu0
    %v1439 = vrot.slane %v1435, 1
    %1441 = vst [vmem:[#allocation4 + $0x6] sm:$0x1] %v1435
    %1442 = vst [vmem:[#allocation4 + $0xe] sm:$0x1] %v1439
    %v1443 = vld [vmem:[%s0 + $0x7] sm:$0x1]
    %v1444 = vld [vmem:[%s0 + $0xf] sm:$0x1]
    %v1445 = vpack.c.bf16 %v1443, %v1443
    %v1446 = vpack.c.bf16 %v1444, %v1444
    %1447 = vmatpush.bf16.msra.mxu0 %v216
    %1448 = vmatpush.bf16.msra.mxu0 %v212
    %1449 = vmatpush.bf16.msra.mxu0 %v208
    %1450 = vmatpush.bf16.msra.mxu0 %v204
    %1451 = vmatpush.bf16.msra.mxu0 %v200
    %1452 = vmatpush.bf16.msra.mxu0 %v196
    %1453 = vmatpush.bf16.msra.mxu0 %v192
    %1454 = vmatpush.bf16.msra.mxu0 %v188
    %1455 = vmatmul.bf16.gmra.mxu0 %v1424
    %v1456 = vpop.f32.mrf.mxu0
    %v1457 = vadd.f32 0.0, %v1456
    %v1458 = vpop.f32.mrf.mxu0
    %1459 = vdwg.mxu0
    %1460 = vmatpush.bf16.msra.mxu0 %v217
    %1461 = vmatpush.bf16.msra.mxu0 %v213
    %1462 = vmatpush.bf16.msra.mxu0 %v209
    %1463 = vmatpush.bf16.msra.mxu0 %v205
    %1464 = vmatpush.bf16.msra.mxu0 %v201
    %1465 = vmatpush.bf16.msra.mxu0 %v197
    %1466 = vmatpush.bf16.msra.mxu0 %v193
    %1467 = vmatpush.bf16.msra.mxu0 %v189
    %1468 = vmatmul.bf16.gmra.mxu0 %v1424
    %v1469 = vpop.f32.mrf.mxu0
    %v1470 = vadd.f32 0.0, %v1469
    %v1471 = vpop.f32.mrf.mxu0
    %1472 = vdwg.mxu0
    %1473 = vmatpush.bf16.msra.mxu0 %v218
    %1474 = vmatpush.bf16.msra.mxu0 %v214
    %1475 = vmatpush.bf16.msra.mxu0 %v210
    %1476 = vmatpush.bf16.msra.mxu0 %v206
    %1477 = vmatpush.bf16.msra.mxu0 %v202
    %1478 = vmatpush.bf16.msra.mxu0 %v198
    %1479 = vmatpush.bf16.msra.mxu0 %v194
    %1480 = vmatpush.bf16.msra.mxu0 %v190
    %1481 = vmatmul.bf16.gmra.mxu0 %v1424
    %v1482 = vpop.f32.mrf.mxu0
    %v1483 = vadd.f32 0.0, %v1482
    %v1484 = vpop.f32.mrf.mxu0
    %1485 = vdwg.mxu0
    %1486 = vmatpush.bf16.msra.mxu0 %v219
    %1487 = vmatpush.bf16.msra.mxu0 %v215
    %1488 = vmatpush.bf16.msra.mxu0 %v211
    %1489 = vmatpush.bf16.msra.mxu0 %v207
    %1490 = vmatpush.bf16.msra.mxu0 %v203
    %1491 = vmatpush.bf16.msra.mxu0 %v199
    %1492 = vmatpush.bf16.msra.mxu0 %v195
    %1493 = vmatpush.bf16.msra.mxu0 %v191
    %1494 = vmatmul.bf16.gmra.mxu0 %v1424
    %v1495 = vpop.f32.mrf.mxu0
    %v1496 = vadd.f32 0.0, %v1495
    %v1497 = vpop.f32.mrf.mxu0
    %1498 = vdwg.mxu0
    %v1501 = vunpack.c.l.b16 %v1445
    %v1502 = vunpack.c.l.b16 %v1446
    %v1503 = vrot.slane %v1502, 7
    %v1504 = vsel %vm309, %v1503, %v1501
    %v1505 = vpack.c.b16 %v1504, %v1504
    %v1507 = vsel %vm332, %v1505, 0
    %1509 = vmatpush.bf16.msra.mxu0 0
    %1510 = vmatpush.bf16.msra.mxu0 0
    %1511 = vmatpush.bf16.msra.mxu0 0
    %1512 = vmatpush.bf16.msra.mxu0 0
    %1513 = vmatpush.bf16.msra.mxu0 0
    %1514 = vmatpush.bf16.msra.mxu0 0
    %1515 = vmatpush.bf16.msra.mxu0 0
    %1516 = vmatpush.bf16.msra.mxu0 %v324
    %1517 = vmatmul.bf16.gmra.mxu0 %v1507
    %v1518 = vpop.f32.mrf.mxu0
    %v1519 = vadd.f32 %v1457, %v1518
    %v1520 = vpop.f32.mrf.mxu0
    %1521 = vdwg.mxu0
    %1522 = vmatpush.bf16.msra.mxu0 0
    %1523 = vmatpush.bf16.msra.mxu0 0
    %1524 = vmatpush.bf16.msra.mxu0 0
    %1525 = vmatpush.bf16.msra.mxu0 0
    %1526 = vmatpush.bf16.msra.mxu0 0
    %1527 = vmatpush.bf16.msra.mxu0 0
    %1528 = vmatpush.bf16.msra.mxu0 0
    %1529 = vmatpush.bf16.msra.mxu0 %v325
    %1530 = vmatmul.bf16.gmra.mxu0 %v1507
    %v1531 = vpop.f32.mrf.mxu0
    %v1532 = vadd.f32 %v1470, %v1531
    %v1533 = vpop.f32.mrf.mxu0
    %1534 = vdwg.mxu0
    %1535 = vmatpush.bf16.msra.mxu0 0
    %1536 = vmatpush.bf16.msra.mxu0 0
    %1537 = vmatpush.bf16.msra.mxu0 0
    %1538 = vmatpush.bf16.msra.mxu0 0
    %1539 = vmatpush.bf16.msra.mxu0 0
    %1540 = vmatpush.bf16.msra.mxu0 0
    %1541 = vmatpush.bf16.msra.mxu0 0
    %1542 = vmatpush.bf16.msra.mxu0 %v326
    %1543 = vmatmul.bf16.gmra.mxu0 %v1507
    %v1544 = vpop.f32.mrf.mxu0
    %v1545 = vadd.f32 %v1483, %v1544
    %v1546 = vpop.f32.mrf.mxu0
    %1547 = vdwg.mxu0
    %1548 = vmatpush.bf16.msra.mxu0 0
    %1549 = vmatpush.bf16.msra.mxu0 0
    %1550 = vmatpush.bf16.msra.mxu0 0
    %1551 = vmatpush.bf16.msra.mxu0 0
    %1552 = vmatpush.bf16.msra.mxu0 0
    %1553 = vmatpush.bf16.msra.mxu0 0
    %1554 = vmatpush.bf16.msra.mxu0 0
    %1555 = vmatpush.bf16.msra.mxu0 %v327
    %1556 = vmatmul.bf16.gmra.mxu0 %v1507
    %v1557 = vpop.f32.mrf.mxu0
    %v1558 = vadd.f32 %v1496, %v1557
    %v1559 = vpop.f32.mrf.mxu0
    %1560 = vdwg.mxu0
    %v1561 = vadd.f32 %v1519, %v389
    %v1562 = vadd.f32 %v1532, %v390
    %v1563 = vadd.f32 %v1545, %v391
    %v1564 = vadd.f32 %v1558, %v392
    %v1565 = vmul.f32 %v1561, 0.5
    %v1566 = vtanh.pop %v1565
    %v1567 = vmul.f32 %v1566, 0.5
    %v1568 = vadd.f32 %v1567, 0.5
    %v1569 = vmul.f32 %v1562, 0.5
    %v1570 = vtanh.pop %v1569
    %v1571 = vmul.f32 %v1570, 0.5
    %v1572 = vadd.f32 %v1571, 0.5
    %v1573 = vtanh.pop %v1563
    %v1574 = vmul.f32 %v1564, 0.5
    %v1575 = vtanh.pop %v1574
    %v1576 = vmul.f32 %v1575, 0.5
    %v1577 = vadd.f32 %v1576, 0.5
    %v1578 = vmul.f32 %v1572, %v1421
    %v1579 = vmul.f32 %v1568, %v1573
    %v1580 = vadd.f32 %v1578, %v1579
    %v1581 = vtanh.pop %v1580
    %v1582 = vmul.f32 %v1577, %v1581
    %v1583 = vpack.c.bf16 %v1582, %v1582
    %1584 = vmatpush.bf16.msra.mxu0 %v462
    %1585 = vmatpush.bf16.msra.mxu0 %v461
    %1586 = vmatpush.bf16.msra.mxu0 %v460
    %1587 = vmatpush.bf16.msra.mxu0 %v459
    %1588 = vmatpush.bf16.msra.mxu0 %v458
    %1589 = vmatpush.bf16.msra.mxu0 %v457
    %1590 = vmatpush.bf16.msra.mxu0 %v456
    %1591 = vmatpush.bf16.msra.mxu0 %v455
    %1592 = vmatmul.bf16.gmra.mxu0 %v1583
    %v1593 = vpop.f32.mrf.mxu0
    %v1594 = vadd.f32 %v421, %v1593
    %v1595 = vpop.f32.mrf.mxu0
    %1596 = vdwg.mxu0
    %v1598 = vrot.slane %v1594, 1
    %1600 = vst [vmem:[#allocation4 + $0x7] sm:$0x1] %v1594
    %1601 = vst [vmem:[#allocation4 + $0xf] sm:$0x1] %v1598
    %1602 = vst [vmem:[#allocation2] sm:$0x3] %v1582
    %1603 = vst [vmem:[#allocation3] sm:$0x3] %v1580
    // Predicated region
    $region30: #{lstm_with_linear.1} parent=1 // pred_check
      _
    $region31: #{lstm_with_linear.1} parent=1 // pred_check_branch
      %1605 = sbr.rel (0) target = $region33
    $region32: #{lstm_with_linear.1} parent=1 // pred_region
      %1607 = vsyncadd [#allocation5], 0
      %s1608 = sshll.u32 [#allocation4], 4
      %s1609 = int_to_ptr.vmem [resolvable:$true] %s1608
      %s1610 = sshll.u32 %s6, 4
      %s1611 = int_to_ptr.hbm [resolvable:$true] %s1610
      %1616 = dma.vmem_to_hbm [thread:$0]  %s1609, 256, %s1611, [#allocation5], 128, 128, 8
    $region33: #{lstm_with_linear.1} parent=1 // pred_fallthru
      _
    // Predicated region
    $region34: #{lstm_with_linear.1} parent=1 // pred_check
      _
    $region35: #{lstm_with_linear.1} parent=1 // pred_check_branch
      %1618 = sbr.rel (0) target = $region37
    $region36: #{lstm_with_linear.1} parent=1 // pred_region
      %1620 = dma.done [#allocation5], 256
    $region37: #{lstm_with_linear.1} parent=1 // pred_fallthru
      _
    %1621 = vsyncpa [#allocation5], 1

</llo_original>
